<compile_context>
chip_gen: v7x
topology: tpu7x:2x2x1
jax: 0.10.0
libtpu: 0.0.40
codegen_flags: <defaults>
</compile_context>

<pallas_src>
import jax
import jax.numpy as jnp
from jax.experimental import pallas as pl
from jax.experimental.pallas import tpu as pltpu

IN_FEATURES = 784
HIDDEN = 300
OUT_FEATURES = 10

HIDDEN_PAD = 384      # 300 -> 3 * 128 lanes
OUT_PAD = 128         # 10  -> 1 full 128-lane vreg (unmasked, lane-dense stores)
IN_LANES_PAD = 896    # 784 -> 7 * 128 lanes (Mosaic lane-pads the x tile)


def _mlp_kernel(x_ref, w1_ref, b1_ref, w2_ref, b2_ref, o_ref):
    # x_ref : (TB, 784) f32     w1_ref: (784, 384) bf16   b1_ref: (1, 384) f32
    # w2_ref: (384, 128) bf16   b2_ref: (1, 128) f32      o_ref : (TB, 128) bf16
    x = x_ref[...].astype(jnp.bfloat16)                                # cast in-kernel (hides under MXU)
    h = jnp.dot(x, w1_ref[...], preferred_element_type=jnp.float32)    # (TB, 384) f32 accum
    h = jnp.maximum(h + b1_ref[...], 0.0)                              # bias + ReLU in f32 (v5e-safe)
    h = h.astype(jnp.bfloat16)                                         # MXU-native for 2nd matmul
    out = jnp.dot(h, w2_ref[...], preferred_element_type=jnp.float32)  # (TB, 128) f32 accum
    o_ref[...] = (out + b2_ref[...]).astype(o_ref.dtype)               # bf16 lane-dense store


def prepare_params(w1, b1, w2, b2):
    """One-time weight padding + bf16 cast, hoisted out of the per-call path.

    w1: (784, 300), b1: (300,), w2: (300, 10), b2: (10,).
    Zero-padding keeps the math identical (padded hidden units are 0 and ReLU(0)=0).
    """
    hidden = w1.shape[1]
    out_features = w2.shape[1]
    w1_p = jnp.zeros((IN_FEATURES, HIDDEN_PAD), jnp.bfloat16).at[:, :hidden].set(
        w1.astype(jnp.bfloat16))
    b1_p = jnp.zeros((1, HIDDEN_PAD), jnp.float32).at[:, :hidden].set(
        b1.astype(jnp.float32))
    w2_p = jnp.zeros((HIDDEN_PAD, OUT_PAD), jnp.bfloat16).at[:hidden, :out_features].set(
        w2.astype(jnp.bfloat16))
    b2_p = jnp.zeros((1, OUT_PAD), jnp.float32).at[:, :out_features].set(
        b2.astype(jnp.float32))
    return (w1_p, b1_p, w2_p, b2_p, out_features)


def _round_up(x, m):
    return ((x + m - 1) // m) * m


def _choose_batch_tile(n):
    # Multiples of 16 (bf16 sublane packing); minimum 16 to avoid half-empty tiles.
    if n <= 256:
        return max(16, _round_up(n, 16))
    # Large tiles amortize per-step pipeline overhead, but cap so big batches
    # still give >= 8 grid steps (keeps both v7x TensorCores busy).
    return int(min(2048, max(256, _round_up(n // 8, 256))))


def linear_classifier_forward(x, prepared_params):
    """relu(x.view(-1, 784) @ w1 + b1) @ w2 + b2 — same math as the torch module."""
    w1_p, b1_p, w2_p, b2_p, out_features = prepared_params
    x2d = x.reshape(-1, IN_FEATURES)
    n = x2d.shape[0]

    tb = _choose_batch_tile(n)
    num_blocks = pl.cdiv(n, tb)
    n_out = num_blocks * tb          # padded output rows; sliced away below

    # VMEM budget: double-buffered x / out tiles (x lane-padded 784 -> 896),
    # resident weights, in-kernel temporaries, + headroom.  Capped for v7x (64 MiB).
    x_tile_bytes = tb * IN_LANES_PAD * 4          # f32 input tile
    out_tile_bytes = tb * OUT_PAD * 2             # bf16 output tile
    weight_bytes = (IN_FEATURES * HIDDEN_PAD * 2 + HIDDEN_PAD * OUT_PAD * 2
                    + 8 * (HIDDEN_PAD + OUT_PAD) * 4)
    tmp_bytes = tb * (IN_LANES_PAD * 2 + HIDDEN_PAD * 6 + OUT_PAD * 4)
    vmem_limit = 2 * (x_tile_bytes + out_tile_bytes) + weight_bytes + tmp_bytes + (8 << 20)
    vmem_limit = int(min(max(vmem_limit, 32 << 20), 56 << 20))

    cost = pl.CostEstimate(
        flops=2 * n_out * (IN_FEATURES * HIDDEN_PAD + HIDDEN_PAD * OUT_PAD),
        transcendentals=0,
        bytes_accessed=n * IN_FEATURES * 4 + weight_bytes + n_out * OUT_PAD * 2,
    )

    out_padded = pl.pallas_call(
        _mlp_kernel,
        out_shape=jax.ShapeDtypeStruct((n_out, OUT_PAD), jnp.bfloat16),
        grid_spec=pltpu.PrefetchScalarGridSpec(
            num_scalar_prefetch=0,
            grid=(num_blocks,),
            in_specs=[
                pl.BlockSpec((tb, IN_FEATURES), lambda i: (i, 0)),          # x tile (pipelined)
                pl.BlockSpec((IN_FEATURES, HIDDEN_PAD), lambda i: (0, 0)),  # w1 (VMEM-resident)
                pl.BlockSpec((1, HIDDEN_PAD), lambda i: (0, 0)),            # b1 (VMEM-resident)
                pl.BlockSpec((HIDDEN_PAD, OUT_PAD), lambda i: (0, 0)),      # w2 (VMEM-resident)
                pl.BlockSpec((1, OUT_PAD), lambda i: (0, 0)),               # b2 (VMEM-resident)
            ],
            out_specs=pl.BlockSpec((tb, OUT_PAD), lambda i: (i, 0)),
        ),
        compiler_params=pltpu.CompilerParams(
            dimension_semantics=("parallel",),
            vmem_limit_bytes=vmem_limit,
        ),
        cost_estimate=cost,
    )(x2d, w1_p, b1_p, w2_p, b2_p)

    return out_padded[:n, :out_features]


def init_params(key, in_features=IN_FEATURES, hidden=HIDDEN, out_features=OUT_FEATURES):
    # Mimics torch.nn.Linear default init: U(-1/sqrt(fan_in), 1/sqrt(fan_in)).
    k1, k2, k3, k4 = jax.random.split(key, 4)
    bound1 = 1.0 / jnp.sqrt(jnp.float32(in_features))
    bound2 = 1.0 / jnp.sqrt(jnp.float32(hidden))
    w1 = jax.random.uniform(k1, (in_features, hidden), jnp.float32, -bound1, bound1)
    b1 = jax.random.uniform(k2, (hidden,), jnp.float32, -bound1, bound1)
    w2 = jax.random.uniform(k3, (hidden, out_features), jnp.float32, -bound2, bound2)
    b2 = jax.random.uniform(k4, (out_features,), jnp.float32, -bound2, bound2)
    return w1, b1, w2, b2


if __name__ == "__main__":
    key = jax.random.PRNGKey(0)
    k_params, k_x = jax.random.split(key)

    w1, b1, w2, b2 = init_params(k_params)
    params = prepare_params(w1, b1, w2, b2)   # one-time pad/cast (hoisted out of forward)

    # Small MNIST-like batch: (N, C, H, W) = (2, 1, 28, 28), flattens to (2, 784).
    x = jax.random.normal(k_x, (2, 1, 28, 28), dtype=jnp.float32)

    out = linear_classifier_forward(x, params)
    out = jax.block_until_ready(out)

    # Cross-check against plain-JAX f32 reference (bf16 matmuls/output -> loose tolerance).
    x2d = x.reshape(-1, IN_FEATURES)
    ref = jnp.maximum(x2d @ w1 + b1, 0.0) @ w2 + b2
    assert out.shape == (2, OUT_FEATURES)
    out_f32 = out.astype(jnp.float32)
    assert jnp.allclose(out_f32, ref, atol=5e-2, rtol=5e-2), (
        f"max abs err {jnp.max(jnp.abs(out_f32 - ref))}")

    print("KERNEL_OK")
</pallas_src>

<mosaic_0001>
module attributes {stable_mosaic.version = 11 : i64} {
  func.func @_mlp_kernel(%arg0: i32, %arg1: memref<16x784xf32, #tpu.memory_space<vmem>>, %arg2: memref<784x384xbf16, #tpu.memory_space<vmem>>, %arg3: memref<1x384xf32, #tpu.memory_space<vmem>>, %arg4: memref<384x128xbf16, #tpu.memory_space<vmem>>, %arg5: memref<1x128xf32, #tpu.memory_space<vmem>>, %arg6: memref<16x128xbf16, #tpu.memory_space<vmem>>) attributes {dimension_semantics = [#tpu.dimension_semantics<parallel>], iteration_bounds = array<i64: 1>, scalar_prefetch = 0 : i64, scratch_operands = 0 : i64, tpu.core_type = #tpu.core_type<tc>, window_params = [{transform_indices = @transform_0, window_bounds = array<i64: 16, 784>}, {pipeline_mode = #tpu.pipeline_mode<synchronous>, transform_indices = @transform_1, window_bounds = array<i64: 784, 384>}, {pipeline_mode = #tpu.pipeline_mode<synchronous>, transform_indices = @transform_2, window_bounds = array<i64: 1, 384>}, {pipeline_mode = #tpu.pipeline_mode<synchronous>, transform_indices = @transform_3, window_bounds = array<i64: 384, 128>}, {pipeline_mode = #tpu.pipeline_mode<synchronous>, transform_indices = @transform_4, window_bounds = array<i64: 1, 128>}, {transform_indices = @transform_5, window_bounds = array<i64: 16, 128>}]} {
    %c0 = arith.constant 0 : index
    %c0_0 = arith.constant 0 : index
    %0 = vector.load %arg1[%c0, %c0_0] : memref<16x784xf32, #tpu.memory_space<vmem>>, vector<16x784xf32>
    %1 = arith.truncf %0 : vector<16x784xf32> to vector<16x784xbf16>
    %c0_1 = arith.constant 0 : index
    %c0_2 = arith.constant 0 : index
    %2 = vector.load %arg2[%c0_1, %c0_2] : memref<784x384xbf16, #tpu.memory_space<vmem>>, vector<784x384xbf16>
    %cst = arith.constant dense<0.000000e+00> : vector<16x384xf32>
    %3 = tpu.matmul %1, %2, %cst {dimension_numbers = #tpu.dot_dimension_numbers<[1], [0], [0], [1], [0, 0, 1, 1], [], []>} : vector<16x784xbf16>, vector<784x384xbf16>, vector<16x384xf32> -> vector<16x384xf32>
    %c0_3 = arith.constant 0 : index
    %c0_4 = arith.constant 0 : index
    %4 = vector.load %arg3[%c0_3, %c0_4] : memref<1x384xf32, #tpu.memory_space<vmem>>, vector<1x384xf32>
    %5 = vector.broadcast %4 : vector<1x384xf32> to vector<16x384xf32>
    %6 = arith.addf %3, %5 : vector<16x384xf32>
    %cst_5 = arith.constant 0.000000e+00 : f32
    %7 = vector.broadcast %cst_5 : f32 to vector<16x384xf32>
    %8 = arith.maximumf %6, %7 : vector<16x384xf32>
    %9 = arith.truncf %8 : vector<16x384xf32> to vector<16x384xbf16>
    %c0_6 = arith.constant 0 : index
    %c0_7 = arith.constant 0 : index
    %10 = vector.load %arg4[%c0_6, %c0_7] : memref<384x128xbf16, #tpu.memory_space<vmem>>, vector<384x128xbf16>
    %cst_8 = arith.constant dense<0.000000e+00> : vector<16x128xf32>
    %11 = tpu.matmul %9, %10, %cst_8 {dimension_numbers = #tpu.dot_dimension_numbers<[1], [0], [0], [1], [0, 0, 1, 1], [], []>} : vector<16x384xbf16>, vector<384x128xbf16>, vector<16x128xf32> -> vector<16x128xf32>
    %c0_9 = arith.constant 0 : index
    %c0_10 = arith.constant 0 : index
    %12 = vector.load %arg5[%c0_9, %c0_10] : memref<1x128xf32, #tpu.memory_space<vmem>>, vector<1x128xf32>
    %13 = vector.broadcast %12 : vector<1x128xf32> to vector<16x128xf32>
    %14 = arith.addf %11, %13 : vector<16x128xf32>
    %15 = arith.truncf %14 : vector<16x128xf32> to vector<16x128xbf16>
    %c0_11 = arith.constant 0 : index
    %c0_12 = arith.constant 0 : index
    %16 = vector.load %arg6[%c0_11, %c0_12] : memref<16x128xbf16, #tpu.memory_space<vmem>>, vector<16x128xbf16>
    tpu.vector_store %arg6[%c0_11, %c0_12], %15 {strides = array<i32>} : memref<16x128xbf16, #tpu.memory_space<vmem>>, vector<16x128xbf16>,
    return
  }
  func.func @transform_0(%arg0: i32) -> (i32, i32) {
    %c0_i32 = arith.constant 0 : i32
    %c0_i32_0 = arith.constant 0 : i32
    return %arg0, %c0_i32 : i32, i32
  }
  func.func @transform_1(%arg0: i32) -> (i32, i32) {
    %c0_i32 = arith.constant 0 : i32
    %c0_i32_0 = arith.constant 0 : i32
    %c0_i32_1 = arith.constant 0 : i32
    return %c0_i32, %c0_i32_0 : i32, i32
  }
  func.func @transform_2(%arg0: i32) -> (i32, i32) {
    %c0_i32 = arith.constant 0 : i32
    %c0_i32_0 = arith.constant 0 : i32
    %c0_i32_1 = arith.constant 0 : i32
    return %c0_i32, %c0_i32_0 : i32, i32
  }
  func.func @transform_3(%arg0: i32) -> (i32, i32) {
    %c0_i32 = arith.constant 0 : i32
    %c0_i32_0 = arith.constant 0 : i32
    %c0_i32_1 = arith.constant 0 : i32
    return %c0_i32, %c0_i32_0 : i32, i32
  }
  func.func @transform_4(%arg0: i32) -> (i32, i32) {
    %c0_i32 = arith.constant 0 : i32
    %c0_i32_0 = arith.constant 0 : i32
    %c0_i32_1 = arith.constant 0 : i32
    return %c0_i32, %c0_i32_0 : i32, i32
  }
  func.func @transform_5(%arg0: i32) -> (i32, i32) {
    %c0_i32 = arith.constant 0 : i32
    %c0_i32_0 = arith.constant 0 : i32
    return %arg0, %c0_i32 : i32, i32
  }
}

</mosaic_0001>

<llo_original>
// kernel: tpu_custom_call.1
$region0: #{tpu_custom_call.1}
  #allocation0 [shape = 'u32[]', space=smem, size = 0x4, offset = 0x4, fixed_abs, tag = 'smem constant byte address 0x4 - core index']
  #allocation1 [shape = 'u32[144,128]{1,0:T(1,128)}', space=vmem, size = 0x12000, scoped, tag = 'internal scratch']
  %s0 = inlined_call_operand.hbm [shape: f32[2,784], index: 0, kind: input, shape index: {}]
  %s1 = inlined_call_operand.hbm [shape: bf16[784,384], index: 1, kind: input, shape index: {}]
  %s2 = inlined_call_operand.vmem [shape: f32[1,384], index: 2, kind: input, shape index: {}]
  %s3 = inlined_call_operand.hbm [shape: bf16[384,128], index: 3, kind: input, shape index: {}]
  %s4 = inlined_call_operand.vmem [shape: f32[1,128], index: 4, kind: input, shape index: {}]
  %s5 = inlined_call_operand.hbm [shape: bf16[16,128], index: 5, kind: output, shape index: {}]
  %s6 = sld [smem:[#allocation0]]
  $region42: #{tpu_custom_call.1} parent=0
    _
  %s8 = ssub.s32 1, %s6
  %s9 = scalar_select 0, %s8, %s6
  $region1: #{tpu_custom_call.1} parent=0
    #allocation2 [shape = 'u8[57344]{0}', space=vmem, size = 0xe000, scoped, tag = 'input window, operand 0, single buffered']
    #allocation3 [shape = 's32[1]{0}', space=sflag, size = 0x4, scoped, tag = 'scoped memory for tpu_custom_call.1']
    #allocation4 [shape = 's32[1]{0}', space=sflag, size = 0x4, scoped, tag = 'scoped memory for tpu_custom_call.1']
    #allocation5 [shape = 'u8[602112]{0}', space=vmem, size = 0x93000, scoped, tag = 'input window, operand 1, single buffered']
    #allocation6 [shape = 's32[1]{0}', space=sflag, size = 0x4, scoped, tag = 'scoped memory for tpu_custom_call.1']
    #allocation7 [shape = 'u8[98304]{0}', space=vmem, size = 0x18000, scoped, tag = 'input window, operand 3, single buffered']
    #allocation8 [shape = 'u8[4096]{0}', space=vmem, size = 0x1000, scoped, tag = 'output window, operand 0, single buffered']
    %10 = vsyncpa [#allocation3], 0
    %11 = vsyncpa [#allocation6], 0
    %12 = vsyncpa [#allocation4], 0
    // Predicated region
    $region2: #{tpu_custom_call.1} parent=1 // pred_check
      _
    $region3: #{tpu_custom_call.1} parent=1 // pred_check_branch
      %14 = sbr.rel (0) target = $region5
    $region4: #{tpu_custom_call.1} parent=1 // pred_region
      %s16 = ssub.s32 1792, 224
      %17 = vsyncadd [#allocation3], %s16
      %s18 = sshll.u32 [#allocation2], 4
      %s19 = int_to_ptr.vmem [resolvable:$true] %s18
      %24 = dma.hbm_to_vmem [thread:$0]  %s0, 224, %s19, [#allocation3], 224, 224, 14
    $region5: #{tpu_custom_call.1} parent=1 // pred_fallthru
      _
    // Predicated region
    $region6: #{tpu_custom_call.1} parent=1 // pred_check
      _
    $region7: #{tpu_custom_call.1} parent=1 // pred_check_branch
      %26 = sbr.rel (0) target = $region9
    $region8: #{tpu_custom_call.1} parent=1 // pred_region
      %s28 = ssub.s32 18816, 18816
      %29 = vsyncadd [#allocation6], %s28
      %s30 = sshll.u32 [#allocation5], 4
      %s31 = int_to_ptr.vmem [resolvable:$true] %s30
      %36 = dma.hbm_to_vmem [thread:$0]  %s1, 18816, %s31, [#allocation6], 192, 192, 12
    $region9: #{tpu_custom_call.1} parent=1 // pred_fallthru
      _
    // Predicated region
    $region10: #{tpu_custom_call.1} parent=1 // pred_check
      _
    $region11: #{tpu_custom_call.1} parent=1 // pred_check_branch
      %38 = sbr.rel (0) target = $region13
    $region12: #{tpu_custom_call.1} parent=1 // pred_region
      _
    $region13: #{tpu_custom_call.1} parent=1 // pred_fallthru
      _
    // Predicated region
    $region14: #{tpu_custom_call.1} parent=1 // pred_check
      _
    $region15: #{tpu_custom_call.1} parent=1 // pred_check_branch
      %40 = sbr.rel (0) target = $region17
    $region16: #{tpu_custom_call.1} parent=1 // pred_region
      %s42 = ssub.s32 3072, 3072
      %43 = vsyncadd [#allocation6], %s42
      %s44 = sshll.u32 [#allocation7], 4
      %s45 = int_to_ptr.vmem [resolvable:$true] %s44
      %50 = dma.hbm_to_vmem [thread:$0]  %s3, 3072, %s45, [#allocation6], 64, 64, 4
    $region17: #{tpu_custom_call.1} parent=1 // pred_fallthru
      _
    // Predicated region
    $region18: #{tpu_custom_call.1} parent=1 // pred_check
      _
    $region19: #{tpu_custom_call.1} parent=1 // pred_check_branch
      %52 = sbr.rel (0) target = $region21
    $region20: #{tpu_custom_call.1} parent=1 // pred_region
      _
    $region21: #{tpu_custom_call.1} parent=1 // pred_fallthru
      _
    // Predicated region
    $region22: #{tpu_custom_call.1} parent=1 // pred_check
      _
    $region23: #{tpu_custom_call.1} parent=1 // pred_check_branch
      %54 = sbr.rel (0) target = $region25
    $region24: #{tpu_custom_call.1} parent=1 // pred_region
      %55 = dma.done [#allocation3], 1792
    $region25: #{tpu_custom_call.1} parent=1 // pred_fallthru
      _
    // Predicated region
    $region26: #{tpu_custom_call.1} parent=1 // pred_check
      _
    $region27: #{tpu_custom_call.1} parent=1 // pred_check_branch
      %57 = sbr.rel (0) target = $region29
    $region28: #{tpu_custom_call.1} parent=1 // pred_region
      %58 = dma.done [#allocation6], 18816
    $region29: #{tpu_custom_call.1} parent=1 // pred_fallthru
      _
    // Predicated region
    $region30: #{tpu_custom_call.1} parent=1 // pred_check
      _
    $region31: #{tpu_custom_call.1} parent=1 // pred_check_branch
      %60 = sbr.rel (0) target = $region33
    $region32: #{tpu_custom_call.1} parent=1 // pred_region
      %61 = dma.done [#allocation6], 3072
    $region33: #{tpu_custom_call.1} parent=1 // pred_fallthru
      _
    %v63 = vld [vmem:[#allocation2] sm:$0xff]
    %v64 = vld [vmem:[#allocation2 + $0x8] sm:$0x3f]
    %v65 = vld [vmem:[#allocation2 + $0xe] sm:$0xff]
    %v66 = vld [vmem:[#allocation2 + $0x16] sm:$0x3f]
    %v67 = vld [vmem:[#allocation2 + $0x1c] sm:$0xff]
    %v68 = vld [vmem:[#allocation2 + $0x24] sm:$0x3f]
    %v69 = vld [vmem:[#allocation2 + $0x2a] sm:$0xff]
    %v70 = vld [vmem:[#allocation2 + $0x32] sm:$0x3f]
    %v71 = vld [vmem:[#allocation2 + $0x38] sm:$0xff]
    %v72 = vld [vmem:[#allocation2 + $0x40] sm:$0x3f]
    %v73 = vld [vmem:[#allocation2 + $0x46] sm:$0xff]
    %v74 = vld [vmem:[#allocation2 + $0x4e] sm:$0x3f]
    %v75 = vld [vmem:[#allocation2 + $0x54] sm:$0xff]
    %v76 = vld [vmem:[#allocation2 + $0x5c] sm:$0x3f]
    %v77 = vld [vmem:[#allocation2 + $0x62] sm:$0xff]
    %v78 = vld [vmem:[#allocation2 + $0x6a] sm:$0x3f]
    %v95 = vcombine.low %v63, %v65
    %v96 = vcombine.high %v63, %v65
    %v97 = vcombine.low %v67, %v69
    %v98 = vcombine.high %v67, %v69
    %v100 = vunpack.c.l.s4 1983009808
    %v101 = vunpack.c.0.s8 %v100
    %v102 = vlaneseq
    %v103 = vshrl.u32 %v102, 7
    %v104 = vsub.s32 %v101, %v103
    %v105 = vrot.slane %v95, %v104
    %v107 = vunpack.c.l.s4 1983009808
    %v108 = vunpack.c.0.s8 %v107
    %v109 = vlaneseq
    %v110 = vshrl.u32 %v109, 7
    %v111 = vsub.s32 %v108, %v110
    %v112 = vrot.slane %v96, %v111
    %v114 = vunpack.c.l.s4 1983009808
    %v115 = vunpack.c.0.s8 %v114
    %v116 = vlaneseq
    %v117 = vshrl.u32 %v116, 7
    %v118 = vsub.s32 %v115, %v117
    %v119 = vrot.slane %v97, %v118
    %v121 = vunpack.c.l.s4 1983009808
    %v122 = vunpack.c.0.s8 %v121
    %v123 = vlaneseq
    %v124 = vshrl.u32 %v123, 7
    %v125 = vsub.s32 %v122, %v124
    %v126 = vrot.slane %v98, %v125
    %v127 = vcombine.low %v105, %v119
    %v128 = vcombine.high %v105, %v119
    %v129 = vcombine.low %v112, %v126
    %v130 = vcombine.high %v112, %v126
    %v131 = vcombine.low %v64, %v66
    %v132 = vcombine.high %v64, %v66
    %v133 = vcombine.low %v68, %v70
    %v134 = vcombine.high %v68, %v70
    %v136 = vunpack.c.l.s4 1983009808
    %v137 = vunpack.c.0.s8 %v136
    %v138 = vlaneseq
    %v139 = vshrl.u32 %v138, 7
    %v140 = vsub.s32 %v137, %v139
    %v141 = vrot.slane %v131, %v140
    %v143 = vunpack.c.l.s4 1983009808
    %v144 = vunpack.c.0.s8 %v143
    %v145 = vlaneseq
    %v146 = vshrl.u32 %v145, 7
    %v147 = vsub.s32 %v144, %v146
    %v148 = vrot.slane %v132, %v147
    %v150 = vunpack.c.l.s4 1983009808
    %v151 = vunpack.c.0.s8 %v150
    %v152 = vlaneseq
    %v153 = vshrl.u32 %v152, 7
    %v154 = vsub.s32 %v151, %v153
    %v155 = vrot.slane %v133, %v154
    %v157 = vunpack.c.l.s4 1983009808
    %v158 = vunpack.c.0.s8 %v157
    %v159 = vlaneseq
    %v160 = vshrl.u32 %v159, 7
    %v161 = vsub.s32 %v158, %v160
    %v162 = vrot.slane %v134, %v161
    %v163 = vcombine.low %v141, %v155
    %v164 = vcombine.high %v141, %v155
    %v165 = vcombine.low %v148, %v162
    %v166 = vcombine.low %v71, %v73
    %v167 = vcombine.high %v71, %v73
    %v168 = vcombine.low %v75, %v77
    %v169 = vcombine.high %v75, %v77
    %v171 = vunpack.c.l.s4 1983009808
    %v172 = vunpack.c.0.s8 %v171
    %v173 = vlaneseq
    %v174 = vshrl.u32 %v173, 7
    %v175 = vsub.s32 %v172, %v174
    %v176 = vrot.slane %v166, %v175
    %v178 = vunpack.c.l.s4 1983009808
    %v179 = vunpack.c.0.s8 %v178
    %v180 = vlaneseq
    %v181 = vshrl.u32 %v180, 7
    %v182 = vsub.s32 %v179, %v181
    %v183 = vrot.slane %v167, %v182
    %v185 = vunpack.c.l.s4 1983009808
    %v186 = vunpack.c.0.s8 %v185
    %v187 = vlaneseq
    %v188 = vshrl.u32 %v187, 7
    %v189 = vsub.s32 %v186, %v188
    %v190 = vrot.slane %v168, %v189
    %v192 = vunpack.c.l.s4 1983009808
    %v193 = vunpack.c.0.s8 %v192
    %v194 = vlaneseq
    %v195 = vshrl.u32 %v194, 7
    %v196 = vsub.s32 %v193, %v195
    %v197 = vrot.slane %v169, %v196
    %v198 = vcombine.low %v176, %v190
    %v199 = vcombine.high %v176, %v190
    %v200 = vcombine.low %v183, %v197
    %v201 = vcombine.high %v183, %v197
    %v202 = vcombine.low %v72, %v74
    %v203 = vcombine.high %v72, %v74
    %v204 = vcombine.low %v76, %v78
    %v205 = vcombine.high %v76, %v78
    %v207 = vunpack.c.l.s4 1983009808
    %v208 = vunpack.c.0.s8 %v207
    %v209 = vlaneseq
    %v210 = vshrl.u32 %v209, 7
    %v211 = vsub.s32 %v208, %v210
    %v212 = vrot.slane %v202, %v211
    %v214 = vunpack.c.l.s4 1983009808
    %v215 = vunpack.c.0.s8 %v214
    %v216 = vlaneseq
    %v217 = vshrl.u32 %v216, 7
    %v218 = vsub.s32 %v215, %v217
    %v219 = vrot.slane %v203, %v218
    %v221 = vunpack.c.l.s4 1983009808
    %v222 = vunpack.c.0.s8 %v221
    %v223 = vlaneseq
    %v224 = vshrl.u32 %v223, 7
    %v225 = vsub.s32 %v222, %v224
    %v226 = vrot.slane %v204, %v225
    %v228 = vunpack.c.l.s4 1983009808
    %v229 = vunpack.c.0.s8 %v228
    %v230 = vlaneseq
    %v231 = vshrl.u32 %v230, 7
    %v232 = vsub.s32 %v229, %v231
    %v233 = vrot.slane %v205, %v232
    %v234 = vcombine.low %v212, %v226
    %v235 = vcombine.high %v212, %v226
    %v236 = vcombine.low %v219, %v233
    %v251 = vpack.c.bf16 %v198, %v127
    %v252 = vpack.c.bf16 %v199, %v128
    %v253 = vpack.c.bf16 %v200, %v129
    %v254 = vpack.c.bf16 %v201, %v130
    %v255 = vpack.c.bf16 %v234, %v163
    %v256 = vpack.c.bf16 %v235, %v164
    %v257 = vpack.c.bf16 %v236, %v165
    %v258 = vld [vmem:[#allocation5] sm:$0xff]
    %v259 = vld [vmem:[#allocation5 + $0x8] sm:$0xf]
    %v260 = vld [vmem:[#allocation5 + $0xc] sm:$0xff]
    %v261 = vld [vmem:[#allocation5 + $0x14] sm:$0xf]
    %v262 = vld [vmem:[#allocation5 + $0x18] sm:$0xff]
    %v263 = vld [vmem:[#allocation5 + $0x20] sm:$0xf]
    %v264 = vld [vmem:[#allocation5 + $0x24] sm:$0xff]
    %v265 = vld [vmem:[#allocation5 + $0x2c] sm:$0xf]
    %v266 = vld [vmem:[#allocation5 + $0x30] sm:$0xff]
    %v267 = vld [vmem:[#allocation5 + $0x38] sm:$0xf]
    %v268 = vld [vmem:[#allocation5 + $0x3c] sm:$0xff]
    %v269 = vld [vmem:[#allocation5 + $0x44] sm:$0xf]
    %v270 = vld [vmem:[#allocation5 + $0x48] sm:$0xff]
    %v271 = vld [vmem:[#allocation5 + $0x50] sm:$0xf]
    %v272 = vld [vmem:[#allocation5 + $0x54] sm:$0xff]
    %v273 = vld [vmem:[#allocation5 + $0x5c] sm:$0xf]
    %v274 = vld [vmem:[#allocation5 + $0x60] sm:$0xff]
    %v275 = vld [vmem:[#allocation5 + $0x68] sm:$0xf]
    %v276 = vld [vmem:[#allocation5 + $0x6c] sm:$0xff]
    %v277 = vld [vmem:[#allocation5 + $0x74] sm:$0xf]
    %v278 = vld [vmem:[#allocation5 + $0x78] sm:$0xff]
    %v279 = vld [vmem:[#allocation5 + $0x80] sm:$0xf]
    %v280 = vld [vmem:[#allocation5 + $0x84] sm:$0xff]
    %v281 = vld [vmem:[#allocation5 + $0x8c] sm:$0xf]
    %v282 = vld [vmem:[#allocation5 + $0x90] sm:$0xff]
    %v283 = vld [vmem:[#allocation5 + $0x98] sm:$0xf]
    %v284 = vld [vmem:[#allocation5 + $0x9c] sm:$0xff]
    %v285 = vld [vmem:[#allocation5 + $0xa4] sm:$0xf]
    %v286 = vld [vmem:[#allocation5 + $0xa8] sm:$0xff]
    %v287 = vld [vmem:[#allocation5 + $0xb0] sm:$0xf]
    %v288 = vld [vmem:[#allocation5 + $0xb4] sm:$0xff]
    %v289 = vld [vmem:[#allocation5 + $0xbc] sm:$0xf]
    %v290 = vld [vmem:[#allocation5 + $0xc0] sm:$0xff]
    %v291 = vld [vmem:[#allocation5 + $0xc8] sm:$0xf]
    %v292 = vld [vmem:[#allocation5 + $0xcc] sm:$0xff]
    %v293 = vld [vmem:[#allocation5 + $0xd4] sm:$0xf]
    %v294 = vld [vmem:[#allocation5 + $0xd8] sm:$0xff]
    %v295 = vld [vmem:[#allocation5 + $0xe0] sm:$0xf]
    %v296 = vld [vmem:[#allocation5 + $0xe4] sm:$0xff]
    %v297 = vld [vmem:[#allocation5 + $0xec] sm:$0xf]
    %v298 = vld [vmem:[#allocation5 + $0xf0] sm:$0xff]
    %v299 = vld [vmem:[#allocation5 + $0xf8] sm:$0xf]
    %v300 = vld [vmem:[#allocation5 + $0xfc] sm:$0xff]
    %v301 = vld [vmem:[#allocation5 + $0x104] sm:$0xf]
    %v302 = vld [vmem:[#allocation5 + $0x108] sm:$0xff]
    %v303 = vld [vmem:[#allocation5 + $0x110] sm:$0xf]
    %v304 = vld [vmem:[#allocation5 + $0x114] sm:$0xff]
    %v305 = vld [vmem:[#allocation5 + $0x11c] sm:$0xf]
    %v306 = vld [vmem:[#allocation5 + $0x120] sm:$0xff]
    %v307 = vld [vmem:[#allocation5 + $0x128] sm:$0xf]
    %v308 = vld [vmem:[#allocation5 + $0x12c] sm:$0xff]
    %v309 = vld [vmem:[#allocation5 + $0x134] sm:$0xf]
    %v310 = vld [vmem:[#allocation5 + $0x138] sm:$0xff]
    %v311 = vld [vmem:[#allocation5 + $0x140] sm:$0xf]
    %v312 = vld [vmem:[#allocation5 + $0x144] sm:$0xff]
    %v313 = vld [vmem:[#allocation5 + $0x14c] sm:$0xf]
    %v314 = vld [vmem:[#allocation5 + $0x150] sm:$0xff]
    %v315 = vld [vmem:[#allocation5 + $0x158] sm:$0xf]
    %v316 = vld [vmem:[#allocation5 + $0x15c] sm:$0xff]
    %v317 = vld [vmem:[#allocation5 + $0x164] sm:$0xf]
    %v318 = vld [vmem:[#allocation5 + $0x168] sm:$0xff]
    %v319 = vld [vmem:[#allocation5 + $0x170] sm:$0xf]
    %v320 = vld [vmem:[#allocation5 + $0x174] sm:$0xff]
    %v321 = vld [vmem:[#allocation5 + $0x17c] sm:$0xf]
    %v322 = vld [vmem:[#allocation5 + $0x180] sm:$0xff]
    %v323 = vld [vmem:[#allocation5 + $0x188] sm:$0xf]
    %v324 = vld [vmem:[#allocation5 + $0x18c] sm:$0xff]
    %v325 = vld [vmem:[#allocation5 + $0x194] sm:$0xf]
    %v326 = vld [vmem:[#allocation5 + $0x198] sm:$0xff]
    %v327 = vld [vmem:[#allocation5 + $0x1a0] sm:$0xf]
    %v328 = vld [vmem:[#allocation5 + $0x1a4] sm:$0xff]
    %v329 = vld [vmem:[#allocation5 + $0x1ac] sm:$0xf]
    %v330 = vld [vmem:[#allocation5 + $0x1b0] sm:$0xff]
    %v331 = vld [vmem:[#allocation5 + $0x1b8] sm:$0xf]
    %v332 = vld [vmem:[#allocation5 + $0x1bc] sm:$0xff]
    %v333 = vld [vmem:[#allocation5 + $0x1c4] sm:$0xf]
    %v334 = vld [vmem:[#allocation5 + $0x1c8] sm:$0xff]
    %v335 = vld [vmem:[#allocation5 + $0x1d0] sm:$0xf]
    %v336 = vld [vmem:[#allocation5 + $0x1d4] sm:$0xff]
    %v337 = vld [vmem:[#allocation5 + $0x1dc] sm:$0xf]
    %v338 = vld [vmem:[#allocation5 + $0x1e0] sm:$0xff]
    %v339 = vld [vmem:[#allocation5 + $0x1e8] sm:$0xf]
    %v340 = vld [vmem:[#allocation5 + $0x1ec] sm:$0xff]
    %v341 = vld [vmem:[#allocation5 + $0x1f4] sm:$0xf]
    %v342 = vld [vmem:[#allocation5 + $0x1f8] sm:$0xff]
    %v343 = vld [vmem:[#allocation5 + $0x200] sm:$0xf]
    %v344 = vld [vmem:[#allocation5 + $0x204] sm:$0xff]
    %v345 = vld [vmem:[#allocation5 + $0x20c] sm:$0xf]
    %v346 = vld [vmem:[#allocation5 + $0x210] sm:$0xff]
    %v347 = vld [vmem:[#allocation5 + $0x218] sm:$0xf]
    %v348 = vld [vmem:[#allocation5 + $0x21c] sm:$0xff]
    %v349 = vld [vmem:[#allocation5 + $0x224] sm:$0xf]
    %v350 = vld [vmem:[#allocation5 + $0x228] sm:$0xff]
    %v351 = vld [vmem:[#allocation5 + $0x230] sm:$0xf]
    %v352 = vld [vmem:[#allocation5 + $0x234] sm:$0xff]
    %v353 = vld [vmem:[#allocation5 + $0x23c] sm:$0xf]
    %v354 = vld [vmem:[#allocation5 + $0x240] sm:$0xff]
    %v355 = vld [vmem:[#allocation5 + $0x248] sm:$0xf]
    %v356 = vld [vmem:[#allocation5 + $0x24c] sm:$0xff]
    %v357 = vld [vmem:[#allocation5 + $0x254] sm:$0xf]
    %v358 = vld [vmem:[#allocation5 + $0x258] sm:$0xff]
    %v359 = vld [vmem:[#allocation5 + $0x260] sm:$0xf]
    %v360 = vld [vmem:[#allocation5 + $0x264] sm:$0xff]
    %v361 = vld [vmem:[#allocation5 + $0x26c] sm:$0xf]
    %v362 = vld [vmem:[#allocation5 + $0x270] sm:$0xff]
    %v363 = vld [vmem:[#allocation5 + $0x278] sm:$0xf]
    %v364 = vld [vmem:[#allocation5 + $0x27c] sm:$0xff]
    %v365 = vld [vmem:[#allocation5 + $0x284] sm:$0xf]
    %v366 = vld [vmem:[#allocation5 + $0x288] sm:$0xff]
    %v367 = vld [vmem:[#allocation5 + $0x290] sm:$0xf]
    %v368 = vld [vmem:[#allocation5 + $0x294] sm:$0xff]
    %v369 = vld [vmem:[#allocation5 + $0x29c] sm:$0xf]
    %v370 = vld [vmem:[#allocation5 + $0x2a0] sm:$0xff]
    %v371 = vld [vmem:[#allocation5 + $0x2a8] sm:$0xf]
    %v372 = vld [vmem:[#allocation5 + $0x2ac] sm:$0xff]
    %v373 = vld [vmem:[#allocation5 + $0x2b4] sm:$0xf]
    %v374 = vld [vmem:[#allocation5 + $0x2b8] sm:$0xff]
    %v375 = vld [vmem:[#allocation5 + $0x2c0] sm:$0xf]
    %v376 = vld [vmem:[#allocation5 + $0x2c4] sm:$0xff]
    %v377 = vld [vmem:[#allocation5 + $0x2cc] sm:$0xf]
    %v378 = vld [vmem:[#allocation5 + $0x2d0] sm:$0xff]
    %v379 = vld [vmem:[#allocation5 + $0x2d8] sm:$0xf]
    %v380 = vld [vmem:[#allocation5 + $0x2dc] sm:$0xff]
    %v381 = vld [vmem:[#allocation5 + $0x2e4] sm:$0xf]
    %v382 = vld [vmem:[#allocation5 + $0x2e8] sm:$0xff]
    %v383 = vld [vmem:[#allocation5 + $0x2f0] sm:$0xf]
    %v384 = vld [vmem:[#allocation5 + $0x2f4] sm:$0xff]
    %v385 = vld [vmem:[#allocation5 + $0x2fc] sm:$0xf]
    %v386 = vld [vmem:[#allocation5 + $0x300] sm:$0xff]
    %v387 = vld [vmem:[#allocation5 + $0x308] sm:$0xf]
    %v388 = vld [vmem:[#allocation5 + $0x30c] sm:$0xff]
    %v389 = vld [vmem:[#allocation5 + $0x314] sm:$0xf]
    %v390 = vld [vmem:[#allocation5 + $0x318] sm:$0xff]
    %v391 = vld [vmem:[#allocation5 + $0x320] sm:$0xf]
    %v392 = vld [vmem:[#allocation5 + $0x324] sm:$0xff]
    %v393 = vld [vmem:[#allocation5 + $0x32c] sm:$0xf]
    %v394 = vld [vmem:[#allocation5 + $0x330] sm:$0xff]
    %v395 = vld [vmem:[#allocation5 + $0x338] sm:$0xf]
    %v396 = vld [vmem:[#allocation5 + $0x33c] sm:$0xff]
    %v397 = vld [vmem:[#allocation5 + $0x344] sm:$0xf]
    %v398 = vld [vmem:[#allocation5 + $0x348] sm:$0xff]
    %v399 = vld [vmem:[#allocation5 + $0x350] sm:$0xf]
    %v400 = vld [vmem:[#allocation5 + $0x354] sm:$0xff]
    %v401 = vld [vmem:[#allocation5 + $0x35c] sm:$0xf]
    %v402 = vld [vmem:[#allocation5 + $0x360] sm:$0xff]
    %v403 = vld [vmem:[#allocation5 + $0x368] sm:$0xf]
    %v404 = vld [vmem:[#allocation5 + $0x36c] sm:$0xff]
    %v405 = vld [vmem:[#allocation5 + $0x374] sm:$0xf]
    %v406 = vld [vmem:[#allocation5 + $0x378] sm:$0xff]
    %v407 = vld [vmem:[#allocation5 + $0x380] sm:$0xf]
    %v408 = vld [vmem:[#allocation5 + $0x384] sm:$0xff]
    %v409 = vld [vmem:[#allocation5 + $0x38c] sm:$0xf]
    %v410 = vld [vmem:[#allocation5 + $0x390] sm:$0xff]
    %v411 = vld [vmem:[#allocation5 + $0x398] sm:$0xf]
    %v412 = vld [vmem:[#allocation5 + $0x39c] sm:$0xff]
    %v413 = vld [vmem:[#allocation5 + $0x3a4] sm:$0xf]
    %v414 = vld [vmem:[#allocation5 + $0x3a8] sm:$0xff]
    %v415 = vld [vmem:[#allocation5 + $0x3b0] sm:$0xf]
    %v416 = vld [vmem:[#allocation5 + $0x3b4] sm:$0xff]
    %v417 = vld [vmem:[#allocation5 + $0x3bc] sm:$0xf]
    %v418 = vld [vmem:[#allocation5 + $0x3c0] sm:$0xff]
    %v419 = vld [vmem:[#allocation5 + $0x3c8] sm:$0xf]
    %v420 = vld [vmem:[#allocation5 + $0x3cc] sm:$0xff]
    %v421 = vld [vmem:[#allocation5 + $0x3d4] sm:$0xf]
    %v422 = vld [vmem:[#allocation5 + $0x3d8] sm:$0xff]
    %v423 = vld [vmem:[#allocation5 + $0x3e0] sm:$0xf]
    %v424 = vld [vmem:[#allocation5 + $0x3e4] sm:$0xff]
    %v425 = vld [vmem:[#allocation5 + $0x3ec] sm:$0xf]
    %v426 = vld [vmem:[#allocation5 + $0x3f0] sm:$0xff]
    %v427 = vld [vmem:[#allocation5 + $0x3f8] sm:$0xf]
    %v428 = vld [vmem:[#allocation5 + $0x3fc] sm:$0xff]
    %v429 = vld [vmem:[#allocation5 + $0x404] sm:$0xf]
    %v430 = vld [vmem:[#allocation5 + $0x408] sm:$0xff]
    %v431 = vld [vmem:[#allocation5 + $0x410] sm:$0xf]
    %v432 = vld [vmem:[#allocation5 + $0x414] sm:$0xff]
    %v433 = vld [vmem:[#allocation5 + $0x41c] sm:$0xf]
    %v434 = vld [vmem:[#allocation5 + $0x420] sm:$0xff]
    %v435 = vld [vmem:[#allocation5 + $0x428] sm:$0xf]
    %v436 = vld [vmem:[#allocation5 + $0x42c] sm:$0xff]
    %v437 = vld [vmem:[#allocation5 + $0x434] sm:$0xf]
    %v438 = vld [vmem:[#allocation5 + $0x438] sm:$0xff]
    %v439 = vld [vmem:[#allocation5 + $0x440] sm:$0xf]
    %v440 = vld [vmem:[#allocation5 + $0x444] sm:$0xff]
    %v441 = vld [vmem:[#allocation5 + $0x44c] sm:$0xf]
    %v442 = vld [vmem:[#allocation5 + $0x450] sm:$0xff]
    %v443 = vld [vmem:[#allocation5 + $0x458] sm:$0xf]
    %v444 = vld [vmem:[#allocation5 + $0x45c] sm:$0xff]
    %v445 = vld [vmem:[#allocation5 + $0x464] sm:$0xf]
    %v446 = vld [vmem:[#allocation5 + $0x468] sm:$0xff]
    %v447 = vld [vmem:[#allocation5 + $0x470] sm:$0xf]
    %v448 = vld [vmem:[#allocation5 + $0x474] sm:$0xff]
    %v449 = vld [vmem:[#allocation5 + $0x47c] sm:$0xf]
    %v450 = vld [vmem:[#allocation5 + $0x480] sm:$0xff]
    %v451 = vld [vmem:[#allocation5 + $0x488] sm:$0xf]
    %v452 = vld [vmem:[#allocation5 + $0x48c] sm:$0xff]
    %v453 = vld [vmem:[#allocation5 + $0x494] sm:$0xf]
    %v454 = vld [vmem:[%s2] sm:$0x7]
    %v456 = vlaneseq
    %v457 = vshrl.u32 %v456, 7
    %v458 = vsub.s32 0, %v457
    %v459 = vrot.slane %v454, %v458
    %v460 = vlaneseq
    %v461 = vshrl.u32 %v460, 7
    %v462 = vsub.s32 1, %v461
    %v463 = vrot.slane %v454, %v462
    %v464 = vlaneseq
    %v465 = vshrl.u32 %v464, 7
    %v466 = vsub.s32 2, %v465
    %v467 = vrot.slane %v454, %v466
    %v667 = vunpack.c.l.b16 %v258
    %v668 = vunpack.c.h.b16 %v258
    %v669 = vunpack.c.l.b16 %v259
    %v670 = vunpack.c.l.b16 %v260
    %v671 = vunpack.c.h.b16 %v260
    %v672 = vunpack.c.l.b16 %v261
    %v673 = vunpack.c.l.b16 %v262
    %v674 = vunpack.c.h.b16 %v262
    %v675 = vunpack.c.l.b16 %v263
    %v676 = vunpack.c.l.b16 %v264
    %v677 = vunpack.c.h.b16 %v264
    %v678 = vunpack.c.l.b16 %v265
    %v679 = vunpack.c.l.b16 %v266
    %v680 = vunpack.c.h.b16 %v266
    %v681 = vunpack.c.l.b16 %v267
    %v682 = vunpack.c.l.b16 %v268
    %v683 = vunpack.c.h.b16 %v268
    %v684 = vunpack.c.l.b16 %v269
    %v685 = vunpack.c.l.b16 %v270
    %v686 = vunpack.c.h.b16 %v270
    %v687 = vunpack.c.l.b16 %v271
    %v688 = vunpack.c.l.b16 %v272
    %v689 = vunpack.c.h.b16 %v272
    %v690 = vunpack.c.l.b16 %v273
    %v691 = vunpack.c.l.b16 %v274
    %v692 = vunpack.c.h.b16 %v274
    %v693 = vunpack.c.l.b16 %v275
    %v694 = vunpack.c.l.b16 %v276
    %v695 = vunpack.c.h.b16 %v276
    %v696 = vunpack.c.l.b16 %v277
    %v697 = vunpack.c.l.b16 %v278
    %v698 = vunpack.c.h.b16 %v278
    %v699 = vunpack.c.l.b16 %v279
    %v700 = vunpack.c.l.b16 %v280
    %v701 = vunpack.c.h.b16 %v280
    %v702 = vunpack.c.l.b16 %v281
    %v703 = vunpack.c.l.b16 %v282
    %v704 = vunpack.c.h.b16 %v282
    %v705 = vunpack.c.l.b16 %v283
    %v706 = vunpack.c.l.b16 %v284
    %v707 = vunpack.c.h.b16 %v284
    %v708 = vunpack.c.l.b16 %v285
    %v709 = vunpack.c.l.b16 %v286
    %v710 = vunpack.c.h.b16 %v286
    %v711 = vunpack.c.l.b16 %v287
    %v712 = vunpack.c.l.b16 %v288
    %v713 = vunpack.c.h.b16 %v288
    %v714 = vunpack.c.l.b16 %v289
    %v715 = vunpack.c.l.b16 %v290
    %v716 = vunpack.c.h.b16 %v290
    %v717 = vunpack.c.l.b16 %v291
    %v718 = vunpack.c.l.b16 %v292
    %v719 = vunpack.c.h.b16 %v292
    %v720 = vunpack.c.l.b16 %v293
    %v721 = vunpack.c.l.b16 %v294
    %v722 = vunpack.c.h.b16 %v294
    %v723 = vunpack.c.l.b16 %v295
    %v724 = vunpack.c.l.b16 %v296
    %v725 = vunpack.c.h.b16 %v296
    %v726 = vunpack.c.l.b16 %v297
    %v727 = vunpack.c.l.b16 %v298
    %v728 = vunpack.c.h.b16 %v298
    %v729 = vunpack.c.l.b16 %v299
    %v730 = vunpack.c.l.b16 %v300
    %v731 = vunpack.c.h.b16 %v300
    %v732 = vunpack.c.l.b16 %v301
    %v733 = vunpack.c.l.b16 %v302
    %v734 = vunpack.c.h.b16 %v302
    %v735 = vunpack.c.l.b16 %v303
    %v736 = vunpack.c.l.b16 %v304
    %v737 = vunpack.c.h.b16 %v304
    %v738 = vunpack.c.l.b16 %v305
    %v739 = vunpack.c.l.b16 %v306
    %v740 = vunpack.c.h.b16 %v306
    %v741 = vunpack.c.l.b16 %v307
    %v742 = vunpack.c.l.b16 %v308
    %v743 = vunpack.c.h.b16 %v308
    %v744 = vunpack.c.l.b16 %v309
    %v745 = vunpack.c.l.b16 %v310
    %v746 = vunpack.c.h.b16 %v310
    %v747 = vunpack.c.l.b16 %v311
    %v748 = vunpack.c.l.b16 %v312
    %v749 = vunpack.c.h.b16 %v312
    %v750 = vunpack.c.l.b16 %v313
    %v751 = vunpack.c.l.b16 %v314
    %v752 = vunpack.c.h.b16 %v314
    %v753 = vunpack.c.l.b16 %v315
    %v754 = vunpack.c.l.b16 %v316
    %v755 = vunpack.c.h.b16 %v316
    %v756 = vunpack.c.l.b16 %v317
    %v757 = vunpack.c.l.b16 %v318
    %v758 = vunpack.c.h.b16 %v318
    %v759 = vunpack.c.l.b16 %v319
    %v760 = vunpack.c.l.b16 %v320
    %v761 = vunpack.c.h.b16 %v320
    %v762 = vunpack.c.l.b16 %v321
    %v763 = vunpack.c.l.b16 %v322
    %v764 = vunpack.c.h.b16 %v322
    %v765 = vunpack.c.l.b16 %v323
    %v766 = vunpack.c.l.b16 %v324
    %v767 = vunpack.c.h.b16 %v324
    %v768 = vunpack.c.l.b16 %v325
    %v769 = vunpack.c.l.b16 %v326
    %v770 = vunpack.c.h.b16 %v326
    %v771 = vunpack.c.l.b16 %v327
    %v772 = vunpack.c.l.b16 %v328
    %v773 = vunpack.c.h.b16 %v328
    %v774 = vunpack.c.l.b16 %v329
    %v775 = vunpack.c.l.b16 %v330
    %v776 = vunpack.c.h.b16 %v330
    %v777 = vunpack.c.l.b16 %v331
    %v778 = vunpack.c.l.b16 %v332
    %v779 = vunpack.c.h.b16 %v332
    %v780 = vunpack.c.l.b16 %v333
    %v781 = vunpack.c.l.b16 %v334
    %v782 = vunpack.c.h.b16 %v334
    %v783 = vunpack.c.l.b16 %v335
    %v784 = vunpack.c.l.b16 %v336
    %v785 = vunpack.c.h.b16 %v336
    %v786 = vunpack.c.l.b16 %v337
    %v787 = vunpack.c.l.b16 %v338
    %v788 = vunpack.c.h.b16 %v338
    %v789 = vunpack.c.l.b16 %v339
    %v790 = vunpack.c.l.b16 %v340
    %v791 = vunpack.c.h.b16 %v340
    %v792 = vunpack.c.l.b16 %v341
    %v793 = vunpack.c.l.b16 %v342
    %v794 = vunpack.c.h.b16 %v342
    %v795 = vunpack.c.l.b16 %v343
    %v796 = vunpack.c.l.b16 %v344
    %v797 = vunpack.c.h.b16 %v344
    %v798 = vunpack.c.l.b16 %v345
    %v799 = vunpack.c.l.b16 %v346
    %v800 = vunpack.c.h.b16 %v346
    %v801 = vunpack.c.l.b16 %v347
    %v802 = vunpack.c.l.b16 %v348
    %v803 = vunpack.c.h.b16 %v348
    %v804 = vunpack.c.l.b16 %v349
    %v805 = vunpack.c.l.b16 %v350
    %v806 = vunpack.c.h.b16 %v350
    %v807 = vunpack.c.l.b16 %v351
    %v808 = vunpack.c.l.b16 %v352
    %v809 = vunpack.c.h.b16 %v352
    %v810 = vunpack.c.l.b16 %v353
    %v811 = vunpack.c.l.b16 %v354
    %v812 = vunpack.c.h.b16 %v354
    %v813 = vunpack.c.l.b16 %v355
    %v814 = vunpack.c.l.b16 %v356
    %v815 = vunpack.c.h.b16 %v356
    %v816 = vunpack.c.l.b16 %v357
    %v817 = vunpack.c.l.b16 %v358
    %v818 = vunpack.c.h.b16 %v358
    %v819 = vunpack.c.l.b16 %v359
    %v820 = vunpack.c.l.b16 %v360
    %v821 = vunpack.c.h.b16 %v360
    %v822 = vunpack.c.l.b16 %v361
    %v823 = vunpack.c.l.b16 %v362
    %v824 = vunpack.c.h.b16 %v362
    %v825 = vunpack.c.l.b16 %v363
    %v826 = vunpack.c.l.b16 %v364
    %v827 = vunpack.c.h.b16 %v364
    %v828 = vunpack.c.l.b16 %v365
    %v829 = vunpack.c.l.b16 %v366
    %v830 = vunpack.c.h.b16 %v366
    %v831 = vunpack.c.l.b16 %v367
    %v832 = vunpack.c.l.b16 %v368
    %v833 = vunpack.c.h.b16 %v368
    %v834 = vunpack.c.l.b16 %v369
    %v835 = vunpack.c.l.b16 %v370
    %v836 = vunpack.c.h.b16 %v370
    %v837 = vunpack.c.l.b16 %v371
    %v838 = vunpack.c.l.b16 %v372
    %v839 = vunpack.c.h.b16 %v372
    %v840 = vunpack.c.l.b16 %v373
    %v841 = vunpack.c.l.b16 %v374
    %v842 = vunpack.c.h.b16 %v374
    %v843 = vunpack.c.l.b16 %v375
    %v844 = vunpack.c.l.b16 %v376
    %v845 = vunpack.c.h.b16 %v376
    %v846 = vunpack.c.l.b16 %v377
    %v847 = vunpack.c.l.b16 %v378
    %v848 = vunpack.c.h.b16 %v378
    %v849 = vunpack.c.l.b16 %v379
    %v850 = vunpack.c.l.b16 %v380
    %v851 = vunpack.c.h.b16 %v380
    %v852 = vunpack.c.l.b16 %v381
    %v853 = vunpack.c.l.b16 %v382
    %v854 = vunpack.c.h.b16 %v382
    %v855 = vunpack.c.l.b16 %v383
    %v856 = vunpack.c.l.b16 %v384
    %v857 = vunpack.c.h.b16 %v384
    %v858 = vunpack.c.l.b16 %v385
    %v859 = vunpack.c.l.b16 %v386
    %v860 = vunpack.c.h.b16 %v386
    %v861 = vunpack.c.l.b16 %v387
    %v862 = vunpack.c.l.b16 %v388
    %v863 = vunpack.c.h.b16 %v388
    %v864 = vunpack.c.l.b16 %v389
    %v865 = vunpack.c.l.b16 %v390
    %v866 = vunpack.c.h.b16 %v390
    %v867 = vunpack.c.l.b16 %v391
    %v868 = vunpack.c.l.b16 %v392
    %v869 = vunpack.c.h.b16 %v392
    %v870 = vunpack.c.l.b16 %v393
    %v871 = vunpack.c.l.b16 %v394
    %v872 = vunpack.c.h.b16 %v394
    %v873 = vunpack.c.l.b16 %v395
    %v874 = vunpack.c.l.b16 %v396
    %v875 = vunpack.c.h.b16 %v396
    %v876 = vunpack.c.l.b16 %v397
    %v877 = vunpack.c.l.b16 %v398
    %v878 = vunpack.c.h.b16 %v398
    %v879 = vunpack.c.l.b16 %v399
    %v880 = vunpack.c.l.b16 %v400
    %v881 = vunpack.c.h.b16 %v400
    %v882 = vunpack.c.l.b16 %v401
    %v883 = vunpack.c.l.b16 %v402
    %v884 = vunpack.c.h.b16 %v402
    %v885 = vunpack.c.l.b16 %v403
    %v886 = vunpack.c.l.b16 %v404
    %v887 = vunpack.c.h.b16 %v404
    %v888 = vunpack.c.l.b16 %v405
    %v889 = vunpack.c.l.b16 %v406
    %v890 = vunpack.c.h.b16 %v406
    %v891 = vunpack.c.l.b16 %v407
    %v892 = vunpack.c.l.b16 %v408
    %v893 = vunpack.c.h.b16 %v408
    %v894 = vunpack.c.l.b16 %v409
    %v895 = vunpack.c.l.b16 %v410
    %v896 = vunpack.c.h.b16 %v410
    %v897 = vunpack.c.l.b16 %v411
    %v898 = vunpack.c.l.b16 %v412
    %v899 = vunpack.c.h.b16 %v412
    %v900 = vunpack.c.l.b16 %v413
    %v901 = vunpack.c.l.b16 %v414
    %v902 = vunpack.c.h.b16 %v414
    %v903 = vunpack.c.l.b16 %v415
    %v904 = vunpack.c.l.b16 %v416
    %v905 = vunpack.c.h.b16 %v416
    %v906 = vunpack.c.l.b16 %v417
    %v907 = vunpack.c.l.b16 %v418
    %v908 = vunpack.c.h.b16 %v418
    %v909 = vunpack.c.l.b16 %v419
    %v910 = vunpack.c.l.b16 %v420
    %v911 = vunpack.c.h.b16 %v420
    %v912 = vunpack.c.l.b16 %v421
    %v913 = vunpack.c.l.b16 %v422
    %v914 = vunpack.c.h.b16 %v422
    %v915 = vunpack.c.l.b16 %v423
    %v916 = vunpack.c.l.b16 %v424
    %v917 = vunpack.c.h.b16 %v424
    %v918 = vunpack.c.l.b16 %v425
    %v919 = vunpack.c.l.b16 %v426
    %v920 = vunpack.c.h.b16 %v426
    %v921 = vunpack.c.l.b16 %v427
    %v922 = vunpack.c.l.b16 %v428
    %v923 = vunpack.c.h.b16 %v428
    %v924 = vunpack.c.l.b16 %v429
    %v925 = vunpack.c.l.b16 %v430
    %v926 = vunpack.c.h.b16 %v430
    %v927 = vunpack.c.l.b16 %v431
    %v928 = vunpack.c.l.b16 %v432
    %v929 = vunpack.c.h.b16 %v432
    %v930 = vunpack.c.l.b16 %v433
    %v931 = vunpack.c.l.b16 %v434
    %v932 = vunpack.c.h.b16 %v434
    %v933 = vunpack.c.l.b16 %v435
    %v934 = vunpack.c.l.b16 %v436
    %v935 = vunpack.c.h.b16 %v436
    %v936 = vunpack.c.l.b16 %v437
    %v937 = vunpack.c.l.b16 %v438
    %v938 = vunpack.c.h.b16 %v438
    %v939 = vunpack.c.l.b16 %v439
    %v940 = vunpack.c.l.b16 %v440
    %v941 = vunpack.c.h.b16 %v440
    %v942 = vunpack.c.l.b16 %v441
    %v943 = vunpack.c.l.b16 %v442
    %v944 = vunpack.c.h.b16 %v442
    %v945 = vunpack.c.l.b16 %v443
    %v946 = vunpack.c.l.b16 %v444
    %v947 = vunpack.c.h.b16 %v444
    %v948 = vunpack.c.l.b16 %v445
    %v949 = vunpack.c.l.b16 %v446
    %v950 = vunpack.c.h.b16 %v446
    %v951 = vunpack.c.l.b16 %v447
    %v952 = vunpack.c.l.b16 %v448
    %v953 = vunpack.c.h.b16 %v448
    %v954 = vunpack.c.l.b16 %v449
    %v955 = vunpack.c.l.b16 %v450
    %v956 = vunpack.c.h.b16 %v450
    %v957 = vunpack.c.l.b16 %v451
    %v958 = vunpack.c.l.b16 %v452
    %v959 = vunpack.c.h.b16 %v452
    %v960 = vunpack.c.l.b16 %v453
    %v961 = vpack.c.b16 %v670, %v667
    %v962 = vpack.c.b16 %v671, %v668
    %v963 = vpack.c.b16 %v672, %v669
    %v964 = vpack.c.b16 %v676, %v673
    %v965 = vpack.c.b16 %v677, %v674
    %v966 = vpack.c.b16 %v678, %v675
    %v967 = vpack.c.b16 %v682, %v679
    %v968 = vpack.c.b16 %v683, %v680
    %v969 = vpack.c.b16 %v684, %v681
    %v970 = vpack.c.b16 %v688, %v685
    %v971 = vpack.c.b16 %v689, %v686
    %v972 = vpack.c.b16 %v690, %v687
    %v973 = vpack.c.b16 %v694, %v691
    %v974 = vpack.c.b16 %v695, %v692
    %v975 = vpack.c.b16 %v696, %v693
    %v976 = vpack.c.b16 %v700, %v697
    %v977 = vpack.c.b16 %v701, %v698
    %v978 = vpack.c.b16 %v702, %v699
    %v979 = vpack.c.b16 %v706, %v703
    %v980 = vpack.c.b16 %v707, %v704
    %v981 = vpack.c.b16 %v708, %v705
    %v982 = vpack.c.b16 %v712, %v709
    %v983 = vpack.c.b16 %v713, %v710
    %v984 = vpack.c.b16 %v714, %v711
    %v985 = vpack.c.b16 %v718, %v715
    %v986 = vpack.c.b16 %v719, %v716
    %v987 = vpack.c.b16 %v720, %v717
    %v988 = vpack.c.b16 %v724, %v721
    %v989 = vpack.c.b16 %v725, %v722
    %v990 = vpack.c.b16 %v726, %v723
    %v991 = vpack.c.b16 %v730, %v727
    %v992 = vpack.c.b16 %v731, %v728
    %v993 = vpack.c.b16 %v732, %v729
    %v994 = vpack.c.b16 %v736, %v733
    %v995 = vpack.c.b16 %v737, %v734
    %v996 = vpack.c.b16 %v738, %v735
    %v997 = vpack.c.b16 %v742, %v739
    %v998 = vpack.c.b16 %v743, %v740
    %v999 = vpack.c.b16 %v744, %v741
    %v1000 = vpack.c.b16 %v748, %v745
    %v1001 = vpack.c.b16 %v749, %v746
    %v1002 = vpack.c.b16 %v750, %v747
    %v1003 = vpack.c.b16 %v754, %v751
    %v1004 = vpack.c.b16 %v755, %v752
    %v1005 = vpack.c.b16 %v756, %v753
    %v1006 = vpack.c.b16 %v760, %v757
    %v1007 = vpack.c.b16 %v761, %v758
    %v1008 = vpack.c.b16 %v762, %v759
    %v1009 = vpack.c.b16 %v766, %v763
    %v1010 = vpack.c.b16 %v767, %v764
    %v1011 = vpack.c.b16 %v768, %v765
    %v1012 = vpack.c.b16 %v772, %v769
    %v1013 = vpack.c.b16 %v773, %v770
    %v1014 = vpack.c.b16 %v774, %v771
    %v1015 = vpack.c.b16 %v778, %v775
    %v1016 = vpack.c.b16 %v779, %v776
    %v1017 = vpack.c.b16 %v780, %v777
    %v1018 = vpack.c.b16 %v784, %v781
    %v1019 = vpack.c.b16 %v785, %v782
    %v1020 = vpack.c.b16 %v786, %v783
    %v1021 = vpack.c.b16 %v790, %v787
    %v1022 = vpack.c.b16 %v791, %v788
    %v1023 = vpack.c.b16 %v792, %v789
    %v1024 = vpack.c.b16 %v796, %v793
    %v1025 = vpack.c.b16 %v797, %v794
    %v1026 = vpack.c.b16 %v798, %v795
    %v1027 = vpack.c.b16 %v802, %v799
    %v1028 = vpack.c.b16 %v803, %v800
    %v1029 = vpack.c.b16 %v804, %v801
    %v1030 = vpack.c.b16 %v808, %v805
    %v1031 = vpack.c.b16 %v809, %v806
    %v1032 = vpack.c.b16 %v810, %v807
    %v1033 = vpack.c.b16 %v814, %v811
    %v1034 = vpack.c.b16 %v815, %v812
    %v1035 = vpack.c.b16 %v816, %v813
    %v1036 = vpack.c.b16 %v820, %v817
    %v1037 = vpack.c.b16 %v821, %v818
    %v1038 = vpack.c.b16 %v822, %v819
    %v1039 = vpack.c.b16 %v826, %v823
    %v1040 = vpack.c.b16 %v827, %v824
    %v1041 = vpack.c.b16 %v828, %v825
    %v1042 = vpack.c.b16 %v832, %v829
    %v1043 = vpack.c.b16 %v833, %v830
    %v1044 = vpack.c.b16 %v834, %v831
    %v1045 = vpack.c.b16 %v838, %v835
    %v1046 = vpack.c.b16 %v839, %v836
    %v1047 = vpack.c.b16 %v840, %v837
    %v1048 = vpack.c.b16 %v844, %v841
    %v1049 = vpack.c.b16 %v845, %v842
    %v1050 = vpack.c.b16 %v846, %v843
    %v1051 = vpack.c.b16 %v850, %v847
    %v1052 = vpack.c.b16 %v851, %v848
    %v1053 = vpack.c.b16 %v852, %v849
    %v1054 = vpack.c.b16 %v856, %v853
    %v1055 = vpack.c.b16 %v857, %v854
    %v1056 = vpack.c.b16 %v858, %v855
    %v1057 = vpack.c.b16 %v862, %v859
    %v1058 = vpack.c.b16 %v863, %v860
    %v1059 = vpack.c.b16 %v864, %v861
    %v1060 = vpack.c.b16 %v868, %v865
    %v1061 = vpack.c.b16 %v869, %v866
    %v1062 = vpack.c.b16 %v870, %v867
    %v1063 = vpack.c.b16 %v874, %v871
    %v1064 = vpack.c.b16 %v875, %v872
    %v1065 = vpack.c.b16 %v876, %v873
    %v1066 = vpack.c.b16 %v880, %v877
    %v1067 = vpack.c.b16 %v881, %v878
    %v1068 = vpack.c.b16 %v882, %v879
    %v1069 = vpack.c.b16 %v886, %v883
    %v1070 = vpack.c.b16 %v887, %v884
    %v1071 = vpack.c.b16 %v888, %v885
    %v1072 = vpack.c.b16 %v892, %v889
    %v1073 = vpack.c.b16 %v893, %v890
    %v1074 = vpack.c.b16 %v894, %v891
    %v1075 = vpack.c.b16 %v898, %v895
    %v1076 = vpack.c.b16 %v899, %v896
    %v1077 = vpack.c.b16 %v900, %v897
    %v1078 = vpack.c.b16 %v904, %v901
    %v1079 = vpack.c.b16 %v905, %v902
    %v1080 = vpack.c.b16 %v906, %v903
    %v1081 = vpack.c.b16 %v910, %v907
    %v1082 = vpack.c.b16 %v911, %v908
    %v1083 = vpack.c.b16 %v912, %v909
    %v1084 = vpack.c.b16 %v916, %v913
    %v1085 = vpack.c.b16 %v917, %v914
    %v1086 = vpack.c.b16 %v918, %v915
    %v1087 = vpack.c.b16 %v922, %v919
    %v1088 = vpack.c.b16 %v923, %v920
    %v1089 = vpack.c.b16 %v924, %v921
    %v1090 = vpack.c.b16 %v928, %v925
    %v1091 = vpack.c.b16 %v929, %v926
    %v1092 = vpack.c.b16 %v930, %v927
    %v1093 = vpack.c.b16 %v934, %v931
    %v1094 = vpack.c.b16 %v935, %v932
    %v1095 = vpack.c.b16 %v936, %v933
    %v1096 = vpack.c.b16 %v940, %v937
    %v1097 = vpack.c.b16 %v941, %v938
    %v1098 = vpack.c.b16 %v942, %v939
    %v1099 = vpack.c.b16 %v946, %v943
    %v1100 = vpack.c.b16 %v947, %v944
    %v1101 = vpack.c.b16 %v948, %v945
    %v1102 = vpack.c.b16 %v952, %v949
    %v1103 = vpack.c.b16 %v953, %v950
    %v1104 = vpack.c.b16 %v954, %v951
    %v1105 = vpack.c.b16 %v958, %v955
    %v1106 = vpack.c.b16 %v959, %v956
    %v1107 = vpack.c.b16 %v960, %v957
    %vm1255 = vcmask 130048
    %v1257 = vsel %vm1255, %v257, 0
    %1259 = vmatprep.subr.bf16.mxu0 %v962
    %1260 = vmatpush1.bf16.msra.mxu0 %v961
    %1261 = vmatprep.subr.bf16.mxu0 %v965
    %1262 = vmatpush1.bf16.msra.mxu0 %v964
    %1263 = vmatprep.subr.bf16.mxu0 %v968
    %1264 = vmatpush1.bf16.msra.mxu0 %v967
    %1265 = vmatprep.subr.bf16.mxu0 %v971
    %1266 = vmatpush1.bf16.msra.mxu0 %v970
    %1267 = vmatprep.subr.bf16.mxu0 %v974
    %1268 = vmatpush1.bf16.msra.mxu0 %v973
    %1269 = vmatprep.subr.bf16.mxu0 %v977
    %1270 = vmatpush1.bf16.msra.mxu0 %v976
    %1271 = vmatprep.subr.bf16.mxu0 %v980
    %1272 = vmatpush1.bf16.msra.mxu0 %v979
    %1273 = vmatprep.subr.bf16.mxu0 %v983
    %1274 = vmatpush1.bf16.msra.mxu0 %v982
    %1275 = vmatprep.subr.bf16.mxu0 %v986
    %1276 = vmatpush1.bf16.msra.mxu0 %v985
    %1277 = vmatprep.subr.bf16.mxu0 %v989
    %1278 = vmatpush1.bf16.msra.mxu0 %v988
    %1279 = vmatprep.subr.bf16.mxu0 %v992
    %1280 = vmatpush1.bf16.msra.mxu0 %v991
    %1281 = vmatprep.subr.bf16.mxu0 %v995
    %1282 = vmatpush1.bf16.msra.mxu0 %v994
    %1283 = vmatprep.subr.bf16.mxu0 %v998
    %1284 = vmatpush1.bf16.msra.mxu0 %v997
    %1285 = vmatprep.subr.bf16.mxu0 %v1001
    %1286 = vmatpush1.bf16.msra.mxu0 %v1000
    %1287 = vmatprep.subr.bf16.mxu0 %v1004
    %1288 = vmatpush1.bf16.msra.mxu0 %v1003
    %1289 = vmatprep.subr.bf16.mxu0 %v1007
    %1290 = vmatpush1.bf16.msra.mxu0 %v1006
    %1291 = vmatprep.mubr.bf16.mxu0 %v252
    %1292 = vmatmul.mubr.bf16.gmra.mrb[0].mxu0 %v251
    %v1293 = vpop.f32.mrb[0].mxu0
    %v1294 = vadd.f32 %v459, %v1293
    %v1295 = vpop.f32.mrb[0].mxu0
    %v1296 = vadd.f32 %v463, %v1295
    %v1297 = vpop.f32.mrb[0].mxu0
    %v1298 = vadd.f32 %v459, %v1297
    %v1299 = vpop.f32.mrb[0].mxu0
    %v1300 = vadd.f32 %v463, %v1299
    %1301 = vdwg.mxu0
    %1302 = vmatprep.subr.bf16.mxu0 %v1010
    %1303 = vmatpush1.bf16.msra.mxu0 %v1009
    %1304 = vmatprep.subr.bf16.mxu0 %v1013
    %1305 = vmatpush1.bf16.msra.mxu0 %v1012
    %1306 = vmatprep.subr.bf16.mxu0 %v1016
    %1307 = vmatpush1.bf16.msra.mxu0 %v1015
    %1308 = vmatprep.subr.bf16.mxu0 %v1019
    %1309 = vmatpush1.bf16.msra.mxu0 %v1018
    %1310 = vmatprep.subr.bf16.mxu0 %v1022
    %1311 = vmatpush1.bf16.msra.mxu0 %v1021
    %1312 = vmatprep.subr.bf16.mxu0 %v1025
    %1313 = vmatpush1.bf16.msra.mxu0 %v1024
    %1314 = vmatprep.subr.bf16.mxu0 %v1028
    %1315 = vmatpush1.bf16.msra.mxu0 %v1027
    %1316 = vmatprep.subr.bf16.mxu0 %v1031
    %1317 = vmatpush1.bf16.msra.mxu0 %v1030
    %1318 = vmatprep.subr.bf16.mxu0 %v1034
    %1319 = vmatpush1.bf16.msra.mxu0 %v1033
    %1320 = vmatprep.subr.bf16.mxu0 %v1037
    %1321 = vmatpush1.bf16.msra.mxu0 %v1036
    %1322 = vmatprep.subr.bf16.mxu0 %v1040
    %1323 = vmatpush1.bf16.msra.mxu0 %v1039
    %1324 = vmatprep.subr.bf16.mxu0 %v1043
    %1325 = vmatpush1.bf16.msra.mxu0 %v1042
    %1326 = vmatprep.subr.bf16.mxu0 %v1046
    %1327 = vmatpush1.bf16.msra.mxu0 %v1045
    %1328 = vmatprep.subr.bf16.mxu0 %v1049
    %1329 = vmatpush1.bf16.msra.mxu0 %v1048
    %1330 = vmatprep.subr.bf16.mxu0 %v1052
    %1331 = vmatpush1.bf16.msra.mxu0 %v1051
    %1332 = vmatprep.subr.bf16.mxu0 %v1055
    %1333 = vmatpush1.bf16.msra.mxu0 %v1054
    %1334 = vmatprep.mubr.bf16.mxu0 %v254
    %1335 = vmatmul.mubr.bf16.gmra.mrb[0].mxu0 %v253
    %v1336 = vpop.f32.mrb[0].mxu0
    %v1337 = vadd.f32 %v1294, %v1336
    %v1338 = vpop.f32.mrb[0].mxu0
    %v1339 = vadd.f32 %v1296, %v1338
    %v1340 = vpop.f32.mrb[0].mxu0
    %v1341 = vadd.f32 %v1298, %v1340
    %v1342 = vpop.f32.mrb[0].mxu0
    %v1343 = vadd.f32 %v1300, %v1342
    %1344 = vdwg.mxu0
    %1345 = vmatprep.subr.bf16.mxu0 %v1058
    %1346 = vmatpush1.bf16.msra.mxu0 %v1057
    %1347 = vmatprep.subr.bf16.mxu0 %v1061
    %1348 = vmatpush1.bf16.msra.mxu0 %v1060
    %1349 = vmatprep.subr.bf16.mxu0 %v1064
    %1350 = vmatpush1.bf16.msra.mxu0 %v1063
    %1351 = vmatprep.subr.bf16.mxu0 %v1067
    %1352 = vmatpush1.bf16.msra.mxu0 %v1066
    %1353 = vmatprep.subr.bf16.mxu0 %v1070
    %1354 = vmatpush1.bf16.msra.mxu0 %v1069
    %1355 = vmatprep.subr.bf16.mxu0 %v1073
    %1356 = vmatpush1.bf16.msra.mxu0 %v1072
    %1357 = vmatprep.subr.bf16.mxu0 %v1076
    %1358 = vmatpush1.bf16.msra.mxu0 %v1075
    %1359 = vmatprep.subr.bf16.mxu0 %v1079
    %1360 = vmatpush1.bf16.msra.mxu0 %v1078
    %1361 = vmatprep.subr.bf16.mxu0 %v1082
    %1362 = vmatpush1.bf16.msra.mxu0 %v1081
    %1363 = vmatprep.subr.bf16.mxu0 %v1085
    %1364 = vmatpush1.bf16.msra.mxu0 %v1084
    %1365 = vmatprep.subr.bf16.mxu0 %v1088
    %1366 = vmatpush1.bf16.msra.mxu0 %v1087
    %1367 = vmatprep.subr.bf16.mxu0 %v1091
    %1368 = vmatpush1.bf16.msra.mxu0 %v1090
    %1369 = vmatprep.subr.bf16.mxu0 %v1094
    %1370 = vmatpush1.bf16.msra.mxu0 %v1093
    %1371 = vmatprep.subr.bf16.mxu0 %v1097
    %1372 = vmatpush1.bf16.msra.mxu0 %v1096
    %1373 = vmatprep.subr.bf16.mxu0 %v1100
    %1374 = vmatpush1.bf16.msra.mxu0 %v1099
    %1375 = vmatprep.subr.bf16.mxu0 %v1103
    %1376 = vmatpush1.bf16.msra.mxu0 %v1102
    %1377 = vmatprep.mubr.bf16.mxu0 %v256
    %1378 = vmatmul.mubr.bf16.gmra.mrb[0].mxu0 %v255
    %v1379 = vpop.f32.mrb[0].mxu0
    %v1380 = vadd.f32 %v1337, %v1379
    %v1381 = vpop.f32.mrb[0].mxu0
    %v1382 = vadd.f32 %v1339, %v1381
    %v1383 = vpop.f32.mrb[0].mxu0
    %v1384 = vadd.f32 %v1341, %v1383
    %v1385 = vpop.f32.mrb[0].mxu0
    %v1386 = vadd.f32 %v1343, %v1385
    %1387 = vdwg.mxu0
    %1388 = vmatprep.subr.bf16.mxu0 %v1106
    %1389 = vmatpush1.bf16.msra.mxu0 %v1105
    %1390 = vmatprep.subr.bf16.mxu0 0
    %1391 = vmatpush1.bf16.msra.mxu0 0
    %1392 = vmatprep.subr.bf16.mxu0 0
    %1393 = vmatpush1.bf16.msra.mxu0 0
    %1394 = vmatprep.subr.bf16.mxu0 0
    %1395 = vmatpush1.bf16.msra.mxu0 0
    %1396 = vmatprep.subr.bf16.mxu0 0
    %1397 = vmatpush1.bf16.msra.mxu0 0
    %1398 = vmatprep.subr.bf16.mxu0 0
    %1399 = vmatpush1.bf16.msra.mxu0 0
    %1400 = vmatprep.subr.bf16.mxu0 0
    %1401 = vmatpush1.bf16.msra.mxu0 0
    %1402 = vmatprep.subr.bf16.mxu0 0
    %1403 = vmatpush1.bf16.msra.mxu0 0
    %1404 = vmatprep.subr.bf16.mxu0 0
    %1405 = vmatpush1.bf16.msra.mxu0 0
    %1406 = vmatprep.subr.bf16.mxu0 0
    %1407 = vmatpush1.bf16.msra.mxu0 0
    %1408 = vmatprep.subr.bf16.mxu0 0
    %1409 = vmatpush1.bf16.msra.mxu0 0
    %1410 = vmatprep.subr.bf16.mxu0 0
    %1411 = vmatpush1.bf16.msra.mxu0 0
    %1412 = vmatprep.subr.bf16.mxu0 0
    %1413 = vmatpush1.bf16.msra.mxu0 0
    %1414 = vmatprep.subr.bf16.mxu0 0
    %1415 = vmatpush1.bf16.msra.mxu0 0
    %1416 = vmatprep.subr.bf16.mxu0 0
    %1417 = vmatpush1.bf16.msra.mxu0 0
    %1418 = vmatprep.subr.bf16.mxu0 0
    %1419 = vmatpush1.bf16.msra.mxu0 0
    %1420 = vmatprep.mubr.bf16.mxu0 0
    %1421 = vmatmul.mubr.bf16.gmra.mrb[0].mxu0 %v1257
    %v1422 = vpop.f32.mrb[0].mxu0
    %v1423 = vadd.f32 %v1380, %v1422
    %v1424 = vpop.f32.mrb[0].mxu0
    %v1425 = vadd.f32 %v1382, %v1424
    %v1426 = vpop.f32.mrb[0].mxu0
    %v1427 = vadd.f32 %v1384, %v1426
    %v1428 = vpop.f32.mrb[0].mxu0
    %v1429 = vadd.f32 %v1386, %v1428
    %1430 = vdwg.mxu0
    %1431 = vmatprep.subr.bf16.mxu0 0
    %1432 = vmatpush1.bf16.msra.mxu0 %v963
    %1433 = vmatprep.subr.bf16.mxu0 0
    %1434 = vmatpush1.bf16.msra.mxu0 %v966
    %1435 = vmatprep.subr.bf16.mxu0 0
    %1436 = vmatpush1.bf16.msra.mxu0 %v969
    %1437 = vmatprep.subr.bf16.mxu0 0
    %1438 = vmatpush1.bf16.msra.mxu0 %v972
    %1439 = vmatprep.subr.bf16.mxu0 0
    %1440 = vmatpush1.bf16.msra.mxu0 %v975
    %1441 = vmatprep.subr.bf16.mxu0 0
    %1442 = vmatpush1.bf16.msra.mxu0 %v978
    %1443 = vmatprep.subr.bf16.mxu0 0
    %1444 = vmatpush1.bf16.msra.mxu0 %v981
    %1445 = vmatprep.subr.bf16.mxu0 0
    %1446 = vmatpush1.bf16.msra.mxu0 %v984
    %1447 = vmatprep.subr.bf16.mxu0 0
    %1448 = vmatpush1.bf16.msra.mxu0 %v987
    %1449 = vmatprep.subr.bf16.mxu0 0
    %1450 = vmatpush1.bf16.msra.mxu0 %v990
    %1451 = vmatprep.subr.bf16.mxu0 0
    %1452 = vmatpush1.bf16.msra.mxu0 %v993
    %1453 = vmatprep.subr.bf16.mxu0 0
    %1454 = vmatpush1.bf16.msra.mxu0 %v996
    %1455 = vmatprep.subr.bf16.mxu0 0
    %1456 = vmatpush1.bf16.msra.mxu0 %v999
    %1457 = vmatprep.subr.bf16.mxu0 0
    %1458 = vmatpush1.bf16.msra.mxu0 %v1002
    %1459 = vmatprep.subr.bf16.mxu0 0
    %1460 = vmatpush1.bf16.msra.mxu0 %v1005
    %1461 = vmatprep.subr.bf16.mxu0 0
    %1462 = vmatpush1.bf16.msra.mxu0 %v1008
    %1463 = vmatprep.mubr.bf16.mxu0 %v252
    %1464 = vmatmul.mubr.bf16.gmra.mrb[0].mxu0 %v251
    %v1465 = vpop.f32.mrb[0].mxu0
    %v1466 = vadd.f32 %v467, %v1465
    %v1467 = vpop.f32.mrb[0].mxu0
    %v1468 = vpop.f32.mrb[0].mxu0
    %v1469 = vadd.f32 %v467, %v1468
    %v1470 = vpop.f32.mrb[0].mxu0
    %1471 = vdwg.mxu0
    %1472 = vmatprep.subr.bf16.mxu0 0
    %1473 = vmatpush1.bf16.msra.mxu0 %v1011
    %1474 = vmatprep.subr.bf16.mxu0 0
    %1475 = vmatpush1.bf16.msra.mxu0 %v1014
    %1476 = vmatprep.subr.bf16.mxu0 0
    %1477 = vmatpush1.bf16.msra.mxu0 %v1017
    %1478 = vmatprep.subr.bf16.mxu0 0
    %1479 = vmatpush1.bf16.msra.mxu0 %v1020
    %1480 = vmatprep.subr.bf16.mxu0 0
    %1481 = vmatpush1.bf16.msra.mxu0 %v1023
    %1482 = vmatprep.subr.bf16.mxu0 0
    %1483 = vmatpush1.bf16.msra.mxu0 %v1026
    %1484 = vmatprep.subr.bf16.mxu0 0
    %1485 = vmatpush1.bf16.msra.mxu0 %v1029
    %1486 = vmatprep.subr.bf16.mxu0 0
    %1487 = vmatpush1.bf16.msra.mxu0 %v1032
    %1488 = vmatprep.subr.bf16.mxu0 0
    %1489 = vmatpush1.bf16.msra.mxu0 %v1035
    %1490 = vmatprep.subr.bf16.mxu0 0
    %1491 = vmatpush1.bf16.msra.mxu0 %v1038
    %1492 = vmatprep.subr.bf16.mxu0 0
    %1493 = vmatpush1.bf16.msra.mxu0 %v1041
    %1494 = vmatprep.subr.bf16.mxu0 0
    %1495 = vmatpush1.bf16.msra.mxu0 %v1044
    %1496 = vmatprep.subr.bf16.mxu0 0
    %1497 = vmatpush1.bf16.msra.mxu0 %v1047
    %1498 = vmatprep.subr.bf16.mxu0 0
    %1499 = vmatpush1.bf16.msra.mxu0 %v1050
    %1500 = vmatprep.subr.bf16.mxu0 0
    %1501 = vmatpush1.bf16.msra.mxu0 %v1053
    %1502 = vmatprep.subr.bf16.mxu0 0
    %1503 = vmatpush1.bf16.msra.mxu0 %v1056
    %1504 = vmatprep.mubr.bf16.mxu0 %v254
    %1505 = vmatmul.mubr.bf16.gmra.mrb[0].mxu0 %v253
    %v1506 = vpop.f32.mrb[0].mxu0
    %v1507 = vadd.f32 %v1466, %v1506
    %v1508 = vpop.f32.mrb[0].mxu0
    %v1509 = vpop.f32.mrb[0].mxu0
    %v1510 = vadd.f32 %v1469, %v1509
    %v1511 = vpop.f32.mrb[0].mxu0
    %1512 = vdwg.mxu0
    %1513 = vmatprep.subr.bf16.mxu0 0
    %1514 = vmatpush1.bf16.msra.mxu0 %v1059
    %1515 = vmatprep.subr.bf16.mxu0 0
    %1516 = vmatpush1.bf16.msra.mxu0 %v1062
    %1517 = vmatprep.subr.bf16.mxu0 0
    %1518 = vmatpush1.bf16.msra.mxu0 %v1065
    %1519 = vmatprep.subr.bf16.mxu0 0
    %1520 = vmatpush1.bf16.msra.mxu0 %v1068
    %1521 = vmatprep.subr.bf16.mxu0 0
    %1522 = vmatpush1.bf16.msra.mxu0 %v1071
    %1523 = vmatprep.subr.bf16.mxu0 0
    %1524 = vmatpush1.bf16.msra.mxu0 %v1074
    %1525 = vmatprep.subr.bf16.mxu0 0
    %1526 = vmatpush1.bf16.msra.mxu0 %v1077
    %1527 = vmatprep.subr.bf16.mxu0 0
    %1528 = vmatpush1.bf16.msra.mxu0 %v1080
    %1529 = vmatprep.subr.bf16.mxu0 0
    %1530 = vmatpush1.bf16.msra.mxu0 %v1083
    %1531 = vmatprep.subr.bf16.mxu0 0
    %1532 = vmatpush1.bf16.msra.mxu0 %v1086
    %1533 = vmatprep.subr.bf16.mxu0 0
    %1534 = vmatpush1.bf16.msra.mxu0 %v1089
    %1535 = vmatprep.subr.bf16.mxu0 0
    %1536 = vmatpush1.bf16.msra.mxu0 %v1092
    %1537 = vmatprep.subr.bf16.mxu0 0
    %1538 = vmatpush1.bf16.msra.mxu0 %v1095
    %1539 = vmatprep.subr.bf16.mxu0 0
    %1540 = vmatpush1.bf16.msra.mxu0 %v1098
    %1541 = vmatprep.subr.bf16.mxu0 0
    %1542 = vmatpush1.bf16.msra.mxu0 %v1101
    %1543 = vmatprep.subr.bf16.mxu0 0
    %1544 = vmatpush1.bf16.msra.mxu0 %v1104
    %1545 = vmatprep.mubr.bf16.mxu0 %v256
    %1546 = vmatmul.mubr.bf16.gmra.mrb[0].mxu0 %v255
    %v1547 = vpop.f32.mrb[0].mxu0
    %v1548 = vadd.f32 %v1507, %v1547
    %v1549 = vpop.f32.mrb[0].mxu0
    %v1550 = vpop.f32.mrb[0].mxu0
    %v1551 = vadd.f32 %v1510, %v1550
    %v1552 = vpop.f32.mrb[0].mxu0
    %1553 = vdwg.mxu0
    %1554 = vmatprep.subr.bf16.mxu0 0
    %1555 = vmatpush1.bf16.msra.mxu0 %v1107
    %1556 = vmatprep.subr.bf16.mxu0 0
    %1557 = vmatpush1.bf16.msra.mxu0 0
    %1558 = vmatprep.subr.bf16.mxu0 0
    %1559 = vmatpush1.bf16.msra.mxu0 0
    %1560 = vmatprep.subr.bf16.mxu0 0
    %1561 = vmatpush1.bf16.msra.mxu0 0
    %1562 = vmatprep.subr.bf16.mxu0 0
    %1563 = vmatpush1.bf16.msra.mxu0 0
    %1564 = vmatprep.subr.bf16.mxu0 0
    %1565 = vmatpush1.bf16.msra.mxu0 0
    %1566 = vmatprep.subr.bf16.mxu0 0
    %1567 = vmatpush1.bf16.msra.mxu0 0
    %1568 = vmatprep.subr.bf16.mxu0 0
    %1569 = vmatpush1.bf16.msra.mxu0 0
    %1570 = vmatprep.subr.bf16.mxu0 0
    %1571 = vmatpush1.bf16.msra.mxu0 0
    %1572 = vmatprep.subr.bf16.mxu0 0
    %1573 = vmatpush1.bf16.msra.mxu0 0
    %1574 = vmatprep.subr.bf16.mxu0 0
    %1575 = vmatpush1.bf16.msra.mxu0 0
    %1576 = vmatprep.subr.bf16.mxu0 0
    %1577 = vmatpush1.bf16.msra.mxu0 0
    %1578 = vmatprep.subr.bf16.mxu0 0
    %1579 = vmatpush1.bf16.msra.mxu0 0
    %1580 = vmatprep.subr.bf16.mxu0 0
    %1581 = vmatpush1.bf16.msra.mxu0 0
    %1582 = vmatprep.subr.bf16.mxu0 0
    %1583 = vmatpush1.bf16.msra.mxu0 0
    %1584 = vmatprep.subr.bf16.mxu0 0
    %1585 = vmatpush1.bf16.msra.mxu0 0
    %1586 = vmatprep.mubr.bf16.mxu0 0
    %1587 = vmatmul.mubr.bf16.gmra.mrb[0].mxu0 %v1257
    %v1588 = vpop.f32.mrb[0].mxu0
    %v1589 = vadd.f32 %v1548, %v1588
    %v1590 = vpop.f32.mrb[0].mxu0
    %v1591 = vpop.f32.mrb[0].mxu0
    %v1592 = vadd.f32 %v1551, %v1591
    %v1593 = vpop.f32.mrb[0].mxu0
    %1594 = vdwg.mxu0
    %v1595 = vmax.f32 %v1423, 0.0
    %v1596 = vmax.f32 %v1425, 0.0
    %v1597 = vmax.f32 %v1589, 0.0
    %v1598 = vmax.f32 %v1427, 0.0
    %v1599 = vmax.f32 %v1429, 0.0
    %v1600 = vmax.f32 %v1592, 0.0
    %v1601 = vpack.c.bf16 %v1598, %v1595
    %v1602 = vpack.c.bf16 %v1599, %v1596
    %v1603 = vpack.c.bf16 %v1600, %v1597
    %v1604 = vld [vmem:[#allocation7] sm:$0xf]
    %v1605 = vld [vmem:[#allocation7 + $0x4] sm:$0xf]
    %v1606 = vld [vmem:[#allocation7 + $0x8] sm:$0xf]
    %v1607 = vld [vmem:[#allocation7 + $0xc] sm:$0xf]
    %v1608 = vld [vmem:[#allocation7 + $0x10] sm:$0xf]
    %v1609 = vld [vmem:[#allocation7 + $0x14] sm:$0xf]
    %v1610 = vld [vmem:[#allocation7 + $0x18] sm:$0xf]
    %v1611 = vld [vmem:[#allocation7 + $0x1c] sm:$0xf]
    %v1612 = vld [vmem:[#allocation7 + $0x20] sm:$0xf]
    %v1613 = vld [vmem:[#allocation7 + $0x24] sm:$0xf]
    %v1614 = vld [vmem:[#allocation7 + $0x28] sm:$0xf]
    %v1615 = vld [vmem:[#allocation7 + $0x2c] sm:$0xf]
    %v1616 = vld [vmem:[#allocation7 + $0x30] sm:$0xf]
    %v1617 = vld [vmem:[#allocation7 + $0x34] sm:$0xf]
    %v1618 = vld [vmem:[#allocation7 + $0x38] sm:$0xf]
    %v1619 = vld [vmem:[#allocation7 + $0x3c] sm:$0xf]
    %v1620 = vld [vmem:[#allocation7 + $0x40] sm:$0xf]
    %v1621 = vld [vmem:[#allocation7 + $0x44] sm:$0xf]
    %v1622 = vld [vmem:[#allocation7 + $0x48] sm:$0xf]
    %v1623 = vld [vmem:[#allocation7 + $0x4c] sm:$0xf]
    %v1624 = vld [vmem:[#allocation7 + $0x50] sm:$0xf]
    %v1625 = vld [vmem:[#allocation7 + $0x54] sm:$0xf]
    %v1626 = vld [vmem:[#allocation7 + $0x58] sm:$0xf]
    %v1627 = vld [vmem:[#allocation7 + $0x5c] sm:$0xf]
    %v1628 = vld [vmem:[#allocation7 + $0x60] sm:$0xf]
    %v1629 = vld [vmem:[#allocation7 + $0x64] sm:$0xf]
    %v1630 = vld [vmem:[#allocation7 + $0x68] sm:$0xf]
    %v1631 = vld [vmem:[#allocation7 + $0x6c] sm:$0xf]
    %v1632 = vld [vmem:[#allocation7 + $0x70] sm:$0xf]
    %v1633 = vld [vmem:[#allocation7 + $0x74] sm:$0xf]
    %v1634 = vld [vmem:[#allocation7 + $0x78] sm:$0xf]
    %v1635 = vld [vmem:[#allocation7 + $0x7c] sm:$0xf]
    %v1636 = vld [vmem:[#allocation7 + $0x80] sm:$0xf]
    %v1637 = vld [vmem:[#allocation7 + $0x84] sm:$0xf]
    %v1638 = vld [vmem:[#allocation7 + $0x88] sm:$0xf]
    %v1639 = vld [vmem:[#allocation7 + $0x8c] sm:$0xf]
    %v1640 = vld [vmem:[#allocation7 + $0x90] sm:$0xf]
    %v1641 = vld [vmem:[#allocation7 + $0x94] sm:$0xf]
    %v1642 = vld [vmem:[#allocation7 + $0x98] sm:$0xf]
    %v1643 = vld [vmem:[#allocation7 + $0x9c] sm:$0xf]
    %v1644 = vld [vmem:[#allocation7 + $0xa0] sm:$0xf]
    %v1645 = vld [vmem:[#allocation7 + $0xa4] sm:$0xf]
    %v1646 = vld [vmem:[#allocation7 + $0xa8] sm:$0xf]
    %v1647 = vld [vmem:[#allocation7 + $0xac] sm:$0xf]
    %v1648 = vld [vmem:[#allocation7 + $0xb0] sm:$0xf]
    %v1649 = vld [vmem:[#allocation7 + $0xb4] sm:$0xf]
    %v1650 = vld [vmem:[#allocation7 + $0xb8] sm:$0xf]
    %v1651 = vld [vmem:[#allocation7 + $0xbc] sm:$0xf]
    %v1652 = vld [vmem:[%s4] sm:$0x1]
    %v1654 = vlaneseq
    %v1655 = vshrl.u32 %v1654, 7
    %v1656 = vsub.s32 0, %v1655
    %v1657 = vrot.slane %v1652, %v1656
    %v1707 = vunpack.c.l.b16 %v1604
    %v1708 = vunpack.c.l.b16 %v1605
    %v1709 = vunpack.c.l.b16 %v1606
    %v1710 = vunpack.c.l.b16 %v1607
    %v1711 = vunpack.c.l.b16 %v1608
    %v1712 = vunpack.c.l.b16 %v1609
    %v1713 = vunpack.c.l.b16 %v1610
    %v1714 = vunpack.c.l.b16 %v1611
    %v1715 = vunpack.c.l.b16 %v1612
    %v1716 = vunpack.c.l.b16 %v1613
    %v1717 = vunpack.c.l.b16 %v1614
    %v1718 = vunpack.c.l.b16 %v1615
    %v1719 = vunpack.c.l.b16 %v1616
    %v1720 = vunpack.c.l.b16 %v1617
    %v1721 = vunpack.c.l.b16 %v1618
    %v1722 = vunpack.c.l.b16 %v1619
    %v1723 = vunpack.c.l.b16 %v1620
    %v1724 = vunpack.c.l.b16 %v1621
    %v1725 = vunpack.c.l.b16 %v1622
    %v1726 = vunpack.c.l.b16 %v1623
    %v1727 = vunpack.c.l.b16 %v1624
    %v1728 = vunpack.c.l.b16 %v1625
    %v1729 = vunpack.c.l.b16 %v1626
    %v1730 = vunpack.c.l.b16 %v1627
    %v1731 = vunpack.c.l.b16 %v1628
    %v1732 = vunpack.c.l.b16 %v1629
    %v1733 = vunpack.c.l.b16 %v1630
    %v1734 = vunpack.c.l.b16 %v1631
    %v1735 = vunpack.c.l.b16 %v1632
    %v1736 = vunpack.c.l.b16 %v1633
    %v1737 = vunpack.c.l.b16 %v1634
    %v1738 = vunpack.c.l.b16 %v1635
    %v1739 = vunpack.c.l.b16 %v1636
    %v1740 = vunpack.c.l.b16 %v1637
    %v1741 = vunpack.c.l.b16 %v1638
    %v1742 = vunpack.c.l.b16 %v1639
    %v1743 = vunpack.c.l.b16 %v1640
    %v1744 = vunpack.c.l.b16 %v1641
    %v1745 = vunpack.c.l.b16 %v1642
    %v1746 = vunpack.c.l.b16 %v1643
    %v1747 = vunpack.c.l.b16 %v1644
    %v1748 = vunpack.c.l.b16 %v1645
    %v1749 = vunpack.c.l.b16 %v1646
    %v1750 = vunpack.c.l.b16 %v1647
    %v1751 = vunpack.c.l.b16 %v1648
    %v1752 = vunpack.c.l.b16 %v1649
    %v1753 = vunpack.c.l.b16 %v1650
    %v1754 = vunpack.c.l.b16 %v1651
    %v1755 = vpack.c.b16 %v1708, %v1707
    %v1756 = vpack.c.b16 %v1710, %v1709
    %v1757 = vpack.c.b16 %v1712, %v1711
    %v1758 = vpack.c.b16 %v1714, %v1713
    %v1759 = vpack.c.b16 %v1716, %v1715
    %v1760 = vpack.c.b16 %v1718, %v1717
    %v1761 = vpack.c.b16 %v1720, %v1719
    %v1762 = vpack.c.b16 %v1722, %v1721
    %v1763 = vpack.c.b16 %v1724, %v1723
    %v1764 = vpack.c.b16 %v1726, %v1725
    %v1765 = vpack.c.b16 %v1728, %v1727
    %v1766 = vpack.c.b16 %v1730, %v1729
    %v1767 = vpack.c.b16 %v1732, %v1731
    %v1768 = vpack.c.b16 %v1734, %v1733
    %v1769 = vpack.c.b16 %v1736, %v1735
    %v1770 = vpack.c.b16 %v1738, %v1737
    %v1771 = vpack.c.b16 %v1740, %v1739
    %v1772 = vpack.c.b16 %v1742, %v1741
    %v1773 = vpack.c.b16 %v1744, %v1743
    %v1774 = vpack.c.b16 %v1746, %v1745
    %v1775 = vpack.c.b16 %v1748, %v1747
    %v1776 = vpack.c.b16 %v1750, %v1749
    %v1777 = vpack.c.b16 %v1752, %v1751
    %v1778 = vpack.c.b16 %v1754, %v1753
    %1803 = vmatprep.subr.bf16.mxu0 0
    %1804 = vmatpush1.bf16.msra.mxu0 %v1755
    %1805 = vmatprep.subr.bf16.mxu0 0
    %1806 = vmatpush1.bf16.msra.mxu0 %v1756
    %1807 = vmatprep.subr.bf16.mxu0 0
    %1808 = vmatpush1.bf16.msra.mxu0 %v1757
    %1809 = vmatprep.subr.bf16.mxu0 0
    %1810 = vmatpush1.bf16.msra.mxu0 %v1758
    %1811 = vmatprep.subr.bf16.mxu0 0
    %1812 = vmatpush1.bf16.msra.mxu0 %v1759
    %1813 = vmatprep.subr.bf16.mxu0 0
    %1814 = vmatpush1.bf16.msra.mxu0 %v1760
    %1815 = vmatprep.subr.bf16.mxu0 0
    %1816 = vmatpush1.bf16.msra.mxu0 %v1761
    %1817 = vmatprep.subr.bf16.mxu0 0
    %1818 = vmatpush1.bf16.msra.mxu0 %v1762
    %1819 = vmatprep.subr.bf16.mxu0 0
    %1820 = vmatpush1.bf16.msra.mxu0 %v1763
    %1821 = vmatprep.subr.bf16.mxu0 0
    %1822 = vmatpush1.bf16.msra.mxu0 %v1764
    %1823 = vmatprep.subr.bf16.mxu0 0
    %1824 = vmatpush1.bf16.msra.mxu0 %v1765
    %1825 = vmatprep.subr.bf16.mxu0 0
    %1826 = vmatpush1.bf16.msra.mxu0 %v1766
    %1827 = vmatprep.subr.bf16.mxu0 0
    %1828 = vmatpush1.bf16.msra.mxu0 %v1767
    %1829 = vmatprep.subr.bf16.mxu0 0
    %1830 = vmatpush1.bf16.msra.mxu0 %v1768
    %1831 = vmatprep.subr.bf16.mxu0 0
    %1832 = vmatpush1.bf16.msra.mxu0 %v1769
    %1833 = vmatprep.subr.bf16.mxu0 0
    %1834 = vmatpush1.bf16.msra.mxu0 %v1770
    %1835 = vmatprep.mubr.bf16.mxu0 %v1602
    %1836 = vmatmul.mubr.bf16.gmra.mrb[0].mxu0 %v1601
    %v1837 = vpop.f32.mrb[0].mxu0
    %v1838 = vadd.f32 %v1657, %v1837
    %v1839 = vpop.f32.mrb[0].mxu0
    %v1840 = vpop.f32.mrb[0].mxu0
    %v1841 = vadd.f32 %v1657, %v1840
    %v1842 = vpop.f32.mrb[0].mxu0
    %1843 = vdwg.mxu0
    %1844 = vmatprep.subr.bf16.mxu0 0
    %1845 = vmatpush1.bf16.msra.mxu0 %v1771
    %1846 = vmatprep.subr.bf16.mxu0 0
    %1847 = vmatpush1.bf16.msra.mxu0 %v1772
    %1848 = vmatprep.subr.bf16.mxu0 0
    %1849 = vmatpush1.bf16.msra.mxu0 %v1773
    %1850 = vmatprep.subr.bf16.mxu0 0
    %1851 = vmatpush1.bf16.msra.mxu0 %v1774
    %1852 = vmatprep.subr.bf16.mxu0 0
    %1853 = vmatpush1.bf16.msra.mxu0 %v1775
    %1854 = vmatprep.subr.bf16.mxu0 0
    %1855 = vmatpush1.bf16.msra.mxu0 %v1776
    %1856 = vmatprep.subr.bf16.mxu0 0
    %1857 = vmatpush1.bf16.msra.mxu0 %v1777
    %1858 = vmatprep.subr.bf16.mxu0 0
    %1859 = vmatpush1.bf16.msra.mxu0 %v1778
    %1860 = vmatprep.subr.bf16.mxu0 0
    %1861 = vmatpush1.bf16.msra.mxu0 0
    %1862 = vmatprep.subr.bf16.mxu0 0
    %1863 = vmatpush1.bf16.msra.mxu0 0
    %1864 = vmatprep.subr.bf16.mxu0 0
    %1865 = vmatpush1.bf16.msra.mxu0 0
    %1866 = vmatprep.subr.bf16.mxu0 0
    %1867 = vmatpush1.bf16.msra.mxu0 0
    %1868 = vmatprep.subr.bf16.mxu0 0
    %1869 = vmatpush1.bf16.msra.mxu0 0
    %1870 = vmatprep.subr.bf16.mxu0 0
    %1871 = vmatpush1.bf16.msra.mxu0 0
    %1872 = vmatprep.subr.bf16.mxu0 0
    %1873 = vmatpush1.bf16.msra.mxu0 0
    %1874 = vmatprep.subr.bf16.mxu0 0
    %1875 = vmatpush1.bf16.msra.mxu0 0
    %1876 = vmatprep.mubr.bf16.mxu0 0
    %1877 = vmatmul.mubr.bf16.gmra.mrb[0].mxu0 %v1603
    %v1878 = vpop.f32.mrb[0].mxu0
    %v1879 = vadd.f32 %v1838, %v1878
    %v1880 = vpop.f32.mrb[0].mxu0
    %v1881 = vpop.f32.mrb[0].mxu0
    %v1882 = vadd.f32 %v1841, %v1881
    %v1883 = vpop.f32.mrb[0].mxu0
    %1884 = vdwg.mxu0
    %v1885 = vpack.c.bf16 %v1882, %v1879
    %v1887 = vunpack.c.l.b16 %v1885
    %v1888 = vunpack.c.h.b16 %v1885
    %v1889 = vpack.c.b16 %v1887, %v1887
    %v1890 = vpack.c.b16 %v1888, %v1888
    %1893 = vst [vmem:[#allocation8] sm:$0xf] %v1889
    %1894 = vst [vmem:[#allocation8 + $0x4] sm:$0xf] %v1890
    // Predicated region
    $region34: #{tpu_custom_call.1} parent=1 // pred_check
      _
    $region35: #{tpu_custom_call.1} parent=1 // pred_check_branch
      %1896 = sbr.rel (0) target = $region37
    $region36: #{tpu_custom_call.1} parent=1 // pred_region
      %s1898 = ssub.s32 128, 128
      %1899 = vsyncadd [#allocation4], %s1898
      %s1900 = sshll.u32 [#allocation8], 4
      %s1901 = int_to_ptr.vmem [resolvable:$true] %s1900
      %1906 = dma.vmem_to_hbm [thread:$0]  %s1901, 128, %s5, [#allocation4], 64, 64, 4
    $region37: #{tpu_custom_call.1} parent=1 // pred_fallthru
      _
    // Predicated region
    $region38: #{tpu_custom_call.1} parent=1 // pred_check
      _
    $region39: #{tpu_custom_call.1} parent=1 // pred_check_branch
      %1908 = sbr.rel (0) target = $region41
    $region40: #{tpu_custom_call.1} parent=1 // pred_region
      %1909 = dma.done [#allocation4], 128
    $region41: #{tpu_custom_call.1} parent=1 // pred_fallthru
      _
    %1910 = vsyncpa [#allocation3], 1
    %1911 = vsyncpa [#allocation6], 1
    %1912 = vsyncpa [#allocation4], 1

</llo_original>
